<compile_context>
chip_gen: v5e
topology: v5e:2x2
jax: 0.10.0
libtpu: 0.0.40
codegen_flags: <defaults>
</compile_context>

<pallas_src>
import jax
import jax.numpy as jnp
from jax.experimental import pallas as pl
from jax.experimental.pallas import tpu as pltpu


def _kara_left(h_ref, xr, xi):
    """(Hr + i Hi) @ (Xr + i Xi), Karatsuba 3-mult.

    h_ref holds [Hr, Hi, Hr+Hi] stacked on axis 0, already in bf16.
    xr/xi are f32 field planes; cast to bf16 at the MXU input, accumulate f32.
    """
    xrb = xr.astype(jnp.bfloat16)
    xib = xi.astype(jnp.bfloat16)
    xsb = (xr + xi).astype(jnp.bfloat16)
    t1 = jnp.dot(h_ref[0], xrb, preferred_element_type=jnp.float32)
    t2 = jnp.dot(h_ref[1], xib, preferred_element_type=jnp.float32)
    t3 = jnp.dot(h_ref[2], xsb, preferred_element_type=jnp.float32)
    return t1 - t2, t3 - t1 - t2


def _kara_right(xr, xi, h_ref):
    """(Xr + i Xi) @ (Hr + i Hi), Karatsuba 3-mult (same packing of h_ref)."""
    xrb = xr.astype(jnp.bfloat16)
    xib = xi.astype(jnp.bfloat16)
    xsb = (xr + xi).astype(jnp.bfloat16)
    t1 = jnp.dot(xrb, h_ref[0], preferred_element_type=jnp.float32)
    t2 = jnp.dot(xib, h_ref[1], preferred_element_type=jnp.float32)
    t3 = jnp.dot(xsb, h_ref[2], preferred_element_type=jnp.float32)
    return t1 - t2, t3 - t1 - t2


def _propagate(hxbd_ref, hyt_ref, r, im):
    """field = Hx_blockdiag @ field @ Hy^T  on the row-stacked (B*H, W) slab."""
    tr, ti = _kara_left(hxbd_ref, r, im)
    return _kara_right(tr, ti, hyt_ref)


def composite_kernel(f_ref, mod_ref, hxbd_ref, hyt_ref, o_ref):
    # Whole batch (row-stacked) in one shot.
    fr = f_ref[0]             # (B*H, W) f32
    fi = f_ref[1]

    # ---- Element0: phase modulator  exp(i*phi0) = c0 + i*s0 ----
    c0 = mod_ref[0]
    s0 = mod_ref[1]
    r = fr * c0 - fi * s0
    im = fr * s0 + fi * c0

    # ---- Element1: propagator ----
    r, im = _propagate(hxbd_ref, hyt_ref, r, im)

    # ---- Element2: phase modulator  exp(i*phi1) ----
    c1 = mod_ref[2]
    s1 = mod_ref[3]
    r2 = r * c1 - im * s1
    i2 = r * s1 + im * c1

    # ---- Element3: propagator (same Hx / Hy^T) ----
    r, im = _propagate(hxbd_ref, hyt_ref, r2, i2)

    o_ref[0] = r
    o_ref[1] = im


def composite_forward(field2, mods, hxbd3, hyt3):
    """field2: (2,B*H,W) f32 [re,im]; mods: (4,B*H,W) f32 [c0,s0,c1,s1];
    hxbd3: (3,B*H,B*H) bf16 block-diag [re,im,re+im]; hyt3: (3,W,W) bf16."""
    _, BH, W = field2.shape

    # 2 propagators * (3 left (BH,BH)@(BH,W) + 3 right (BH,W)@(W,W)) real matmuls.
    flops = 2 * (3 * 2 * BH * BH * W + 3 * 2 * BH * W * W)
    bytes_accessed = (field2.size * 4 + mods.size * 4
                      + hxbd3.size * 2 + hyt3.size * 2
                      + field2.size * 4)   # output same size as field

    full = lambda shape: pl.BlockSpec(shape, lambda i: (0,) * len(shape))

    return pl.pallas_call(
        composite_kernel,
        out_shape=jax.ShapeDtypeStruct((2, BH, W), jnp.float32),
        grid_spec=pltpu.PrefetchScalarGridSpec(
            num_scalar_prefetch=0,
            grid=(1,),
            in_specs=[
                full((2, BH, W)),    # field re/im (row-stacked batch)
                full((4, BH, W)),    # modulators (batch-tiled)
                full((3, BH, BH)),   # block-diag Hx (bf16)
                full((3, W, W)),     # Hy^T (bf16)
            ],
            out_specs=full((2, BH, W)),
        ),
        compiler_params=pltpu.CompilerParams(
            dimension_semantics=("arbitrary",)),
        cost_estimate=pl.CostEstimate(
            flops=flops, transcendentals=0, bytes_accessed=bytes_accessed),
    )(field2, mods, hxbd3, hyt3)


def _fresnel_matrix(n, dx, wavelength, z):
    """Deterministic 1-D separable Fresnel propagation matrix (n, n), complex64."""
    idx = jnp.arange(n, dtype=jnp.float32)
    x = (idx - n / 2.0) * dx
    diff = x[:, None] - x[None, :]
    phase = jnp.pi * diff * diff / (wavelength * z)
    scale = jnp.float32(dx / jnp.sqrt(wavelength * z))
    return (scale * (jnp.cos(phase) + 1j * jnp.sin(phase))).astype(jnp.complex64)


def reference_forward(field_c, phi0, hx, hy, phi1):
    """Plain-JAX complex reference of the 4-element chain."""
    f = field_c * jnp.exp(1j * phi0)[None]
    f = jnp.einsum('ij,bjk,lk->bil', hx, f, hy)
    f = f * jnp.exp(1j * phi1)[None]
    f = jnp.einsum('ij,bjk,lk->bil', hx, f, hy)
    return f


if __name__ == "__main__":
    # TODO(synk): the PyTorch forward's `distance=`/`elements=` early-exit options
    # (partial propagation) are runtime-dynamic control flow over the element list
    # and are not expressed in this static-chain kernel.
    B, H, W = 2, 64, 128

    key = jax.random.PRNGKey(0)
    k_fr, k_fi, k_p0, k_p1 = jax.random.split(key, 4)

    field_re = jax.random.normal(k_fr, (B, H, W), dtype=jnp.float32)
    field_im = jax.random.normal(k_fi, (B, H, W), dtype=jnp.float32)
    field_c = (field_re + 1j * field_im).astype(jnp.complex64)

    # Deterministic parameters: modulator phases + Fresnel propagator matrices.
    phi0 = jax.random.uniform(k_p0, (H, W), minval=0.0, maxval=2.0 * jnp.pi,
                              dtype=jnp.float32)
    phi1 = jax.random.uniform(k_p1, (H, W), minval=0.0, maxval=2.0 * jnp.pi,
                              dtype=jnp.float32)
    wavelength = 0.5e-6
    dx = 1.0e-6
    z = 1.0e-3
    hx = _fresnel_matrix(H, dx, wavelength, z)   # (H, H) complex64
    hy = _fresnel_matrix(W, dx, wavelength, z)   # (W, W) complex64

    # ---- Pack operands for the kernel (all transcendentals hoisted here) ----
    # Modulators: cos/sin planes, tiled across the row-stacked batch.
    m0c, m0s = jnp.cos(phi0), jnp.sin(phi0)
    m1c, m1s = jnp.cos(phi1), jnp.sin(phi1)
    mods = jnp.stack([jnp.tile(m0c, (B, 1)), jnp.tile(m0s, (B, 1)),
                      jnp.tile(m1c, (B, 1)), jnp.tile(m1s, (B, 1))],
                     axis=0)                                      # (4, B*H, W) f32

    # Left propagator: block-diagonal over the batch (B*H, B*H), Karatsuba triple.
    hxr, hxi = jnp.real(hx), jnp.imag(hx)
    eye_b = jnp.eye(B, dtype=jnp.float32)
    hxbd3 = jnp.stack([jnp.kron(eye_b, hxr),
                       jnp.kron(eye_b, hxi),
                       jnp.kron(eye_b, hxr + hxi)],
                      axis=0).astype(jnp.bfloat16)                # (3, B*H, B*H)

    # Right propagator: kernel consumes Hy^T, Karatsuba triple.
    hyt = hy.T
    hytr, hyti = jnp.real(hyt), jnp.imag(hyt)
    hyt3 = jnp.stack([hytr, hyti, hytr + hyti],
                     axis=0).astype(jnp.bfloat16)                 # (3, W, W)

    # Field: row-stack the batch -> (2, B*H, W) f32 [re, im].
    field2 = jnp.stack([field_re.reshape(B * H, W),
                        field_im.reshape(B * H, W)], axis=0)

    out = composite_forward(field2, mods, hxbd3, hyt3)
    out = jax.block_until_ready(out)
    out_re = out[0].reshape(B, H, W)
    out_im = out[1].reshape(B, H, W)

    ref = reference_forward(field_c, phi0, hx, hy, phi1)
    # bf16 MXU inputs (f32 accumulation): relative error ~1e-2; tolerance set
    # accordingly (still far below any sign/transpose-bug-sized discrepancy).
    ok_re = jnp.allclose(out_re, jnp.real(ref), atol=1e-2, rtol=1e-2)
    ok_im = jnp.allclose(out_im, jnp.imag(ref), atol=1e-2, rtol=1e-2)
    assert bool(ok_re) and bool(ok_im), "Pallas kernel mismatch vs JAX reference"

    print("KERNEL_OK")
</pallas_src>

<mosaic_0001>
module attributes {stable_mosaic.version = 11 : i64} {
  func.func @composite_kernel(%arg0: i32, %arg1: memref<2x128x128xf32, #tpu.memory_space<vmem>>, %arg2: memref<4x128x128xf32, #tpu.memory_space<vmem>>, %arg3: memref<3x128x128xbf16, #tpu.memory_space<vmem>>, %arg4: memref<3x128x128xbf16, #tpu.memory_space<vmem>>, %arg5: memref<2x128x128xf32, #tpu.memory_space<vmem>>) attributes {dimension_semantics = [#tpu.dimension_semantics<arbitrary>], iteration_bounds = array<i64: 1>, scalar_prefetch = 0 : i64, scratch_operands = 0 : i64, tpu.core_type = #tpu.core_type<tc>, window_params = [{pipeline_mode = #tpu.pipeline_mode<synchronous>, transform_indices = @transform_0, window_bounds = array<i64: 2, 128, 128>}, {pipeline_mode = #tpu.pipeline_mode<synchronous>, transform_indices = @transform_1, window_bounds = array<i64: 4, 128, 128>}, {pipeline_mode = #tpu.pipeline_mode<synchronous>, transform_indices = @transform_2, window_bounds = array<i64: 3, 128, 128>}, {pipeline_mode = #tpu.pipeline_mode<synchronous>, transform_indices = @transform_3, window_bounds = array<i64: 3, 128, 128>}, {pipeline_mode = #tpu.pipeline_mode<synchronous>, transform_indices = @transform_4, window_bounds = array<i64: 2, 128, 128>}]} {
    %c0 = arith.constant 0 : index
    %c0_0 = arith.constant 0 : index
    %c0_1 = arith.constant 0 : index
    %0 = vector.load %arg1[%c0, %c0_0, %c0_1] : memref<2x128x128xf32, #tpu.memory_space<vmem>>, vector<1x128x128xf32>
    %1 = vector.shape_cast %0 : vector<1x128x128xf32> to vector<128x128xf32>
    %c1 = arith.constant 1 : index
    %c0_2 = arith.constant 0 : index
    %c0_3 = arith.constant 0 : index
    %2 = vector.load %arg1[%c1, %c0_2, %c0_3] : memref<2x128x128xf32, #tpu.memory_space<vmem>>, vector<1x128x128xf32>
    %3 = vector.shape_cast %2 : vector<1x128x128xf32> to vector<128x128xf32>
    %c0_4 = arith.constant 0 : index
    %c0_5 = arith.constant 0 : index
    %c0_6 = arith.constant 0 : index
    %4 = vector.load %arg2[%c0_4, %c0_5, %c0_6] : memref<4x128x128xf32, #tpu.memory_space<vmem>>, vector<1x128x128xf32>
    %5 = vector.shape_cast %4 : vector<1x128x128xf32> to vector<128x128xf32>
    %c1_7 = arith.constant 1 : index
    %c0_8 = arith.constant 0 : index
    %c0_9 = arith.constant 0 : index
    %6 = vector.load %arg2[%c1_7, %c0_8, %c0_9] : memref<4x128x128xf32, #tpu.memory_space<vmem>>, vector<1x128x128xf32>
    %7 = vector.shape_cast %6 : vector<1x128x128xf32> to vector<128x128xf32>
    %8 = arith.mulf %1, %5 : vector<128x128xf32>
    %9 = arith.mulf %3, %7 : vector<128x128xf32>
    %10 = arith.subf %8, %9 : vector<128x128xf32>
    %11 = arith.mulf %1, %7 : vector<128x128xf32>
    %12 = arith.mulf %3, %5 : vector<128x128xf32>
    %13 = arith.addf %11, %12 : vector<128x128xf32>
    %14 = arith.truncf %10 : vector<128x128xf32> to vector<128x128xbf16>
    %15 = arith.truncf %13 : vector<128x128xf32> to vector<128x128xbf16>
    %16 = arith.addf %10, %13 : vector<128x128xf32>
    %17 = arith.truncf %16 : vector<128x128xf32> to vector<128x128xbf16>
    %c0_10 = arith.constant 0 : index
    %c0_11 = arith.constant 0 : index
    %c0_12 = arith.constant 0 : index
    %18 = vector.load %arg3[%c0_10, %c0_11, %c0_12] : memref<3x128x128xbf16, #tpu.memory_space<vmem>>, vector<1x128x128xbf16>
    %19 = vector.shape_cast %18 : vector<1x128x128xbf16> to vector<128x128xbf16>
    %cst = arith.constant dense<0.000000e+00> : vector<128x128xf32>
    %20 = tpu.matmul %19, %14, %cst {dimension_numbers = #tpu.dot_dimension_numbers<[1], [0], [0], [1], [0, 0, 1, 1], [], []>} : vector<128x128xbf16>, vector<128x128xbf16>, vector<128x128xf32> -> vector<128x128xf32>
    %c1_13 = arith.constant 1 : index
    %c0_14 = arith.constant 0 : index
    %c0_15 = arith.constant 0 : index
    %21 = vector.load %arg3[%c1_13, %c0_14, %c0_15] : memref<3x128x128xbf16, #tpu.memory_space<vmem>>, vector<1x128x128xbf16>
    %22 = vector.shape_cast %21 : vector<1x128x128xbf16> to vector<128x128xbf16>
    %cst_16 = arith.constant dense<0.000000e+00> : vector<128x128xf32>
    %23 = tpu.matmul %22, %15, %cst_16 {dimension_numbers = #tpu.dot_dimension_numbers<[1], [0], [0], [1], [0, 0, 1, 1], [], []>} : vector<128x128xbf16>, vector<128x128xbf16>, vector<128x128xf32> -> vector<128x128xf32>
    %c2 = arith.constant 2 : index
    %c0_17 = arith.constant 0 : index
    %c0_18 = arith.constant 0 : index
    %24 = vector.load %arg3[%c2, %c0_17, %c0_18] : memref<3x128x128xbf16, #tpu.memory_space<vmem>>, vector<1x128x128xbf16>
    %25 = vector.shape_cast %24 : vector<1x128x128xbf16> to vector<128x128xbf16>
    %cst_19 = arith.constant dense<0.000000e+00> : vector<128x128xf32>
    %26 = tpu.matmul %25, %17, %cst_19 {dimension_numbers = #tpu.dot_dimension_numbers<[1], [0], [0], [1], [0, 0, 1, 1], [], []>} : vector<128x128xbf16>, vector<128x128xbf16>, vector<128x128xf32> -> vector<128x128xf32>
    %27 = arith.subf %20, %23 : vector<128x128xf32>
    %28 = arith.subf %26, %20 : vector<128x128xf32>
    %29 = arith.subf %28, %23 : vector<128x128xf32>
    %30 = arith.truncf %27 : vector<128x128xf32> to vector<128x128xbf16>
    %31 = arith.truncf %29 : vector<128x128xf32> to vector<128x128xbf16>
    %32 = arith.addf %27, %29 : vector<128x128xf32>
    %33 = arith.truncf %32 : vector<128x128xf32> to vector<128x128xbf16>
    %c0_20 = arith.constant 0 : index
    %c0_21 = arith.constant 0 : index
    %c0_22 = arith.constant 0 : index
    %34 = vector.load %arg4[%c0_20, %c0_21, %c0_22] : memref<3x128x128xbf16, #tpu.memory_space<vmem>>, vector<1x128x128xbf16>
    %35 = vector.shape_cast %34 : vector<1x128x128xbf16> to vector<128x128xbf16>
    %cst_23 = arith.constant dense<0.000000e+00> : vector<128x128xf32>
    %36 = tpu.matmul %30, %35, %cst_23 {dimension_numbers = #tpu.dot_dimension_numbers<[1], [0], [0], [1], [0, 0, 1, 1], [], []>} : vector<128x128xbf16>, vector<128x128xbf16>, vector<128x128xf32> -> vector<128x128xf32>
    %c1_24 = arith.constant 1 : index
    %c0_25 = arith.constant 0 : index
    %c0_26 = arith.constant 0 : index
    %37 = vector.load %arg4[%c1_24, %c0_25, %c0_26] : memref<3x128x128xbf16, #tpu.memory_space<vmem>>, vector<1x128x128xbf16>
    %38 = vector.shape_cast %37 : vector<1x128x128xbf16> to vector<128x128xbf16>
    %cst_27 = arith.constant dense<0.000000e+00> : vector<128x128xf32>
    %39 = tpu.matmul %31, %38, %cst_27 {dimension_numbers = #tpu.dot_dimension_numbers<[1], [0], [0], [1], [0, 0, 1, 1], [], []>} : vector<128x128xbf16>, vector<128x128xbf16>, vector<128x128xf32> -> vector<128x128xf32>
    %c2_28 = arith.constant 2 : index
    %c0_29 = arith.constant 0 : index
    %c0_30 = arith.constant 0 : index
    %40 = vector.load %arg4[%c2_28, %c0_29, %c0_30] : memref<3x128x128xbf16, #tpu.memory_space<vmem>>, vector<1x128x128xbf16>
    %41 = vector.shape_cast %40 : vector<1x128x128xbf16> to vector<128x128xbf16>
    %cst_31 = arith.constant dense<0.000000e+00> : vector<128x128xf32>
    %42 = tpu.matmul %33, %41, %cst_31 {dimension_numbers = #tpu.dot_dimension_numbers<[1], [0], [0], [1], [0, 0, 1, 1], [], []>} : vector<128x128xbf16>, vector<128x128xbf16>, vector<128x128xf32> -> vector<128x128xf32>
    %43 = arith.subf %36, %39 : vector<128x128xf32>
    %44 = arith.subf %42, %36 : vector<128x128xf32>
    %45 = arith.subf %44, %39 : vector<128x128xf32>
    %c2_32 = arith.constant 2 : index
    %c0_33 = arith.constant 0 : index
    %c0_34 = arith.constant 0 : index
    %46 = vector.load %arg2[%c2_32, %c0_33, %c0_34] : memref<4x128x128xf32, #tpu.memory_space<vmem>>, vector<1x128x128xf32>
    %47 = vector.shape_cast %46 : vector<1x128x128xf32> to vector<128x128xf32>
    %c3 = arith.constant 3 : index
    %c0_35 = arith.constant 0 : index
    %c0_36 = arith.constant 0 : index
    %48 = vector.load %arg2[%c3, %c0_35, %c0_36] : memref<4x128x128xf32, #tpu.memory_space<vmem>>, vector<1x128x128xf32>
    %49 = vector.shape_cast %48 : vector<1x128x128xf32> to vector<128x128xf32>
    %50 = arith.mulf %43, %47 : vector<128x128xf32>
    %51 = arith.mulf %45, %49 : vector<128x128xf32>
    %52 = arith.subf %50, %51 : vector<128x128xf32>
    %53 = arith.mulf %43, %49 : vector<128x128xf32>
    %54 = arith.mulf %45, %47 : vector<128x128xf32>
    %55 = arith.addf %53, %54 : vector<128x128xf32>
    %56 = arith.truncf %52 : vector<128x128xf32> to vector<128x128xbf16>
    %57 = arith.truncf %55 : vector<128x128xf32> to vector<128x128xbf16>
    %58 = arith.addf %52, %55 : vector<128x128xf32>
    %59 = arith.truncf %58 : vector<128x128xf32> to vector<128x128xbf16>
    %c0_37 = arith.constant 0 : index
    %c0_38 = arith.constant 0 : index
    %c0_39 = arith.constant 0 : index
    %60 = vector.load %arg3[%c0_37, %c0_38, %c0_39] : memref<3x128x128xbf16, #tpu.memory_space<vmem>>, vector<1x128x128xbf16>
    %61 = vector.shape_cast %60 : vector<1x128x128xbf16> to vector<128x128xbf16>
    %cst_40 = arith.constant dense<0.000000e+00> : vector<128x128xf32>
    %62 = tpu.matmul %61, %56, %cst_40 {dimension_numbers = #tpu.dot_dimension_numbers<[1], [0], [0], [1], [0, 0, 1, 1], [], []>} : vector<128x128xbf16>, vector<128x128xbf16>, vector<128x128xf32> -> vector<128x128xf32>
    %c1_41 = arith.constant 1 : index
    %c0_42 = arith.constant 0 : index
    %c0_43 = arith.constant 0 : index
    %63 = vector.load %arg3[%c1_41, %c0_42, %c0_43] : memref<3x128x128xbf16, #tpu.memory_space<vmem>>, vector<1x128x128xbf16>
    %64 = vector.shape_cast %63 : vector<1x128x128xbf16> to vector<128x128xbf16>
    %cst_44 = arith.constant dense<0.000000e+00> : vector<128x128xf32>
    %65 = tpu.matmul %64, %57, %cst_44 {dimension_numbers = #tpu.dot_dimension_numbers<[1], [0], [0], [1], [0, 0, 1, 1], [], []>} : vector<128x128xbf16>, vector<128x128xbf16>, vector<128x128xf32> -> vector<128x128xf32>
    %c2_45 = arith.constant 2 : index
    %c0_46 = arith.constant 0 : index
    %c0_47 = arith.constant 0 : index
    %66 = vector.load %arg3[%c2_45, %c0_46, %c0_47] : memref<3x128x128xbf16, #tpu.memory_space<vmem>>, vector<1x128x128xbf16>
    %67 = vector.shape_cast %66 : vector<1x128x128xbf16> to vector<128x128xbf16>
    %cst_48 = arith.constant dense<0.000000e+00> : vector<128x128xf32>
    %68 = tpu.matmul %67, %59, %cst_48 {dimension_numbers = #tpu.dot_dimension_numbers<[1], [0], [0], [1], [0, 0, 1, 1], [], []>} : vector<128x128xbf16>, vector<128x128xbf16>, vector<128x128xf32> -> vector<128x128xf32>
    %69 = arith.subf %62, %65 : vector<128x128xf32>
    %70 = arith.subf %68, %62 : vector<128x128xf32>
    %71 = arith.subf %70, %65 : vector<128x128xf32>
    %72 = arith.truncf %69 : vector<128x128xf32> to vector<128x128xbf16>
    %73 = arith.truncf %71 : vector<128x128xf32> to vector<128x128xbf16>
    %74 = arith.addf %69, %71 : vector<128x128xf32>
    %75 = arith.truncf %74 : vector<128x128xf32> to vector<128x128xbf16>
    %c0_49 = arith.constant 0 : index
    %c0_50 = arith.constant 0 : index
    %c0_51 = arith.constant 0 : index
    %76 = vector.load %arg4[%c0_49, %c0_50, %c0_51] : memref<3x128x128xbf16, #tpu.memory_space<vmem>>, vector<1x128x128xbf16>
    %77 = vector.shape_cast %76 : vector<1x128x128xbf16> to vector<128x128xbf16>
    %cst_52 = arith.constant dense<0.000000e+00> : vector<128x128xf32>
    %78 = tpu.matmul %72, %77, %cst_52 {dimension_numbers = #tpu.dot_dimension_numbers<[1], [0], [0], [1], [0, 0, 1, 1], [], []>} : vector<128x128xbf16>, vector<128x128xbf16>, vector<128x128xf32> -> vector<128x128xf32>
    %c1_53 = arith.constant 1 : index
    %c0_54 = arith.constant 0 : index
    %c0_55 = arith.constant 0 : index
    %79 = vector.load %arg4[%c1_53, %c0_54, %c0_55] : memref<3x128x128xbf16, #tpu.memory_space<vmem>>, vector<1x128x128xbf16>
    %80 = vector.shape_cast %79 : vector<1x128x128xbf16> to vector<128x128xbf16>
    %cst_56 = arith.constant dense<0.000000e+00> : vector<128x128xf32>
    %81 = tpu.matmul %73, %80, %cst_56 {dimension_numbers = #tpu.dot_dimension_numbers<[1], [0], [0], [1], [0, 0, 1, 1], [], []>} : vector<128x128xbf16>, vector<128x128xbf16>, vector<128x128xf32> -> vector<128x128xf32>
    %c2_57 = arith.constant 2 : index
    %c0_58 = arith.constant 0 : index
    %c0_59 = arith.constant 0 : index
    %82 = vector.load %arg4[%c2_57, %c0_58, %c0_59] : memref<3x128x128xbf16, #tpu.memory_space<vmem>>, vector<1x128x128xbf16>
    %83 = vector.shape_cast %82 : vector<1x128x128xbf16> to vector<128x128xbf16>
    %cst_60 = arith.constant dense<0.000000e+00> : vector<128x128xf32>
    %84 = tpu.matmul %75, %83, %cst_60 {dimension_numbers = #tpu.dot_dimension_numbers<[1], [0], [0], [1], [0, 0, 1, 1], [], []>} : vector<128x128xbf16>, vector<128x128xbf16>, vector<128x128xf32> -> vector<128x128xf32>
    %85 = arith.subf %78, %81 : vector<128x128xf32>
    %86 = arith.subf %84, %78 : vector<128x128xf32>
    %87 = arith.subf %86, %81 : vector<128x128xf32>
    %c0_61 = arith.constant 0 : index
    %c0_62 = arith.constant 0 : index
    %c0_63 = arith.constant 0 : index
    %88 = vector.load %arg5[%c0_61, %c0_62, %c0_63] : memref<2x128x128xf32, #tpu.memory_space<vmem>>, vector<1x128x128xf32>
    %89 = vector.shape_cast %88 : vector<1x128x128xf32> to vector<128x128xf32>
    %90 = vector.shape_cast %85 : vector<128x128xf32> to vector<1x128x128xf32>
    tpu.vector_store %arg5[%c0_61, %c0_62, %c0_63], %90 {strides = array<i32>} : memref<2x128x128xf32, #tpu.memory_space<vmem>>, vector<1x128x128xf32>,
    %c1_64 = arith.constant 1 : index
    %c0_65 = arith.constant 0 : index
    %c0_66 = arith.constant 0 : index
    %91 = vector.load %arg5[%c1_64, %c0_65, %c0_66] : memref<2x128x128xf32, #tpu.memory_space<vmem>>, vector<1x128x128xf32>
    %92 = vector.shape_cast %91 : vector<1x128x128xf32> to vector<128x128xf32>
    %93 = vector.shape_cast %87 : vector<128x128xf32> to vector<1x128x128xf32>
    tpu.vector_store %arg5[%c1_64, %c0_65, %c0_66], %93 {strides = array<i32>} : memref<2x128x128xf32, #tpu.memory_space<vmem>>, vector<1x128x128xf32>,
    return
  }
  func.func @transform_0(%arg0: i32) -> (i32, i32, i32) {
    %c0_i32 = arith.constant 0 : i32
    %c0_i32_0 = arith.constant 0 : i32
    %c0_i32_1 = arith.constant 0 : i32
    %c0_i32_2 = arith.constant 0 : i32
    return %c0_i32, %c0_i32_0, %c0_i32_1 : i32, i32, i32
  }
  func.func @transform_1(%arg0: i32) -> (i32, i32, i32) {
    %c0_i32 = arith.constant 0 : i32
    %c0_i32_0 = arith.constant 0 : i32
    %c0_i32_1 = arith.constant 0 : i32
    %c0_i32_2 = arith.constant 0 : i32
    return %c0_i32, %c0_i32_0, %c0_i32_1 : i32, i32, i32
  }
  func.func @transform_2(%arg0: i32) -> (i32, i32, i32) {
    %c0_i32 = arith.constant 0 : i32
    %c0_i32_0 = arith.constant 0 : i32
    %c0_i32_1 = arith.constant 0 : i32
    %c0_i32_2 = arith.constant 0 : i32
    return %c0_i32, %c0_i32_0, %c0_i32_1 : i32, i32, i32
  }
  func.func @transform_3(%arg0: i32) -> (i32, i32, i32) {
    %c0_i32 = arith.constant 0 : i32
    %c0_i32_0 = arith.constant 0 : i32
    %c0_i32_1 = arith.constant 0 : i32
    %c0_i32_2 = arith.constant 0 : i32
    return %c0_i32, %c0_i32_0, %c0_i32_1 : i32, i32, i32
  }
  func.func @transform_4(%arg0: i32) -> (i32, i32, i32) {
    %c0_i32 = arith.constant 0 : i32
    %c0_i32_0 = arith.constant 0 : i32
    %c0_i32_1 = arith.constant 0 : i32
    %c0_i32_2 = arith.constant 0 : i32
    return %c0_i32, %c0_i32_0, %c0_i32_1 : i32, i32, i32
  }
}

</mosaic_0001>

<llo_original>
// kernel: tpu_custom_call.1
$region0: #{tpu_custom_call.1}
  #allocation0 [shape = 'u32[]', space=smem, size = 0x4, offset = 0x4, fixed_abs, tag = 'smem constant byte address 0x4 - core index']
  #allocation1 [shape = 'u32[72,128]{1,0:T(1,128)}', space=vmem, size = 0x9000, scoped, tag = 'internal scratch']
  %s0 = inlined_call_operand.hbm [shape: f32[2,128,128], index: 0, kind: input, shape index: {}]
  %s1 = inlined_call_operand.hbm [shape: f32[4,128,128], index: 1, kind: input, shape index: {}]
  %s2 = inlined_call_operand.hbm [shape: bf16[3,128,128], index: 2, kind: input, shape index: {}]
  %s3 = inlined_call_operand.hbm [shape: bf16[3,128,128], index: 3, kind: input, shape index: {}]
  %s4 = inlined_call_operand.hbm [shape: f32[2,128,128], index: 4, kind: output, shape index: {}]
  %s5 = sld [smem:[#allocation0]]
  $region42: #{tpu_custom_call.1} parent=0
    _
  %s7 = ssub.s32 1, %s5
  %s8 = scalar_select 0, %s7, %s5
  $region1: #{tpu_custom_call.1} parent=0
    #allocation2 [shape = 'u8[131072]{0}', space=vmem, size = 0x20000, scoped, tag = 'input window, operand 0, single buffered']
    #allocation3 [shape = 's32[1]{0}', space=sflag, size = 0x4, scoped, tag = 'scoped memory for tpu_custom_call.1']
    #allocation4 [shape = 's32[1]{0}', space=sflag, size = 0x4, scoped, tag = 'scoped memory for tpu_custom_call.1']
    #allocation5 [shape = 'u8[262144]{0}', space=vmem, size = 0x40000, scoped, tag = 'input window, operand 1, single buffered']
    #allocation6 [shape = 's32[1]{0}', space=sflag, size = 0x4, scoped, tag = 'scoped memory for tpu_custom_call.1']
    #allocation7 [shape = 'u8[98304]{0}', space=vmem, size = 0x18000, scoped, tag = 'input window, operand 2, single buffered']
    #allocation8 [shape = 'u8[98304]{0}', space=vmem, size = 0x18000, scoped, tag = 'input window, operand 3, single buffered']
    #allocation9 [shape = 's32[1]{0}', space=sflag, size = 0x4, scoped, tag = 'scoped memory for tpu_custom_call.1']
    #allocation10 [shape = 'u8[131072]{0}', space=vmem, size = 0x20000, scoped, tag = 'output window, operand 0, single buffered']
    %9 = vsyncpa [#allocation3], 0
    %10 = vsyncpa [#allocation6], 0
    %11 = vsyncpa [#allocation9], 0
    %12 = vsyncpa [#allocation4], 0
    // Predicated region
    $region2: #{tpu_custom_call.1} parent=1 // pred_check
      _
    $region3: #{tpu_custom_call.1} parent=1 // pred_check_branch
      %14 = sbr.rel (0) target = $region5
    $region4: #{tpu_custom_call.1} parent=1 // pred_region
      %16 = vsyncadd [#allocation3], 0
      %s17 = sshll.u32 %s0, 4
      %s18 = int_to_ptr.hbm [resolvable:$true] %s17
      %s19 = sshll.u32 [#allocation2], 4
      %s20 = int_to_ptr.vmem [resolvable:$true] %s19
      %25 = dma.hbm_to_vmem [thread:$0]  %s18, 4096, %s20, [#allocation3], 128, 128, 8
    $region5: #{tpu_custom_call.1} parent=1 // pred_fallthru
      _
    // Predicated region
    $region6: #{tpu_custom_call.1} parent=1 // pred_check
      _
    $region7: #{tpu_custom_call.1} parent=1 // pred_check_branch
      %27 = sbr.rel (0) target = $region9
    $region8: #{tpu_custom_call.1} parent=1 // pred_region
      %29 = vsyncadd [#allocation6], 0
      %s30 = sshll.u32 %s1, 4
      %s31 = int_to_ptr.hbm [resolvable:$true] %s30
      %s32 = sshll.u32 [#allocation5], 4
      %s33 = int_to_ptr.vmem [resolvable:$true] %s32
      %38 = dma.hbm_to_vmem [thread:$0]  %s31, 8192, %s33, [#allocation6], 128, 128, 8
    $region9: #{tpu_custom_call.1} parent=1 // pred_fallthru
      _
    // Predicated region
    $region10: #{tpu_custom_call.1} parent=1 // pred_check
      _
    $region11: #{tpu_custom_call.1} parent=1 // pred_check_branch
      %40 = sbr.rel (0) target = $region13
    $region12: #{tpu_custom_call.1} parent=1 // pred_region
      %42 = vsyncadd [#allocation6], 0
      %s43 = sshll.u32 %s2, 4
      %s44 = int_to_ptr.hbm [resolvable:$true] %s43
      %s45 = sshll.u32 [#allocation7], 4
      %s46 = int_to_ptr.vmem [resolvable:$true] %s45
      %51 = dma.hbm_to_vmem [thread:$0]  %s44, 3072, %s46, [#allocation6], 64, 64, 4
    $region13: #{tpu_custom_call.1} parent=1 // pred_fallthru
      _
    // Predicated region
    $region14: #{tpu_custom_call.1} parent=1 // pred_check
      _
    $region15: #{tpu_custom_call.1} parent=1 // pred_check_branch
      %53 = sbr.rel (0) target = $region17
    $region16: #{tpu_custom_call.1} parent=1 // pred_region
      %55 = vsyncadd [#allocation9], 0
      %s56 = sshll.u32 %s3, 4
      %s57 = int_to_ptr.hbm [resolvable:$true] %s56
      %s58 = sshll.u32 [#allocation8], 4
      %s59 = int_to_ptr.vmem [resolvable:$true] %s58
      %64 = dma.hbm_to_vmem [thread:$0]  %s57, 3072, %s59, [#allocation9], 64, 64, 4
    $region17: #{tpu_custom_call.1} parent=1 // pred_fallthru
      _
    // Predicated region
    $region18: #{tpu_custom_call.1} parent=1 // pred_check
      _
    $region19: #{tpu_custom_call.1} parent=1 // pred_check_branch
      %66 = sbr.rel (0) target = $region21
    $region20: #{tpu_custom_call.1} parent=1 // pred_region
      %68 = dma.done [#allocation3], 4096
    $region21: #{tpu_custom_call.1} parent=1 // pred_fallthru
      _
    // Predicated region
    $region22: #{tpu_custom_call.1} parent=1 // pred_check
      _
    $region23: #{tpu_custom_call.1} parent=1 // pred_check_branch
      %70 = sbr.rel (0) target = $region25
    $region24: #{tpu_custom_call.1} parent=1 // pred_region
      %72 = dma.done [#allocation6], 8192
    $region25: #{tpu_custom_call.1} parent=1 // pred_fallthru
      _
    // Predicated region
    $region26: #{tpu_custom_call.1} parent=1 // pred_check
      _
    $region27: #{tpu_custom_call.1} parent=1 // pred_check_branch
      %74 = sbr.rel (0) target = $region29
    $region28: #{tpu_custom_call.1} parent=1 // pred_region
      %76 = dma.done [#allocation6], 3072
    $region29: #{tpu_custom_call.1} parent=1 // pred_fallthru
      _
    // Predicated region
    $region30: #{tpu_custom_call.1} parent=1 // pred_check
      _
    $region31: #{tpu_custom_call.1} parent=1 // pred_check_branch
      %78 = sbr.rel (0) target = $region33
    $region32: #{tpu_custom_call.1} parent=1 // pred_region
      %80 = dma.done [#allocation9], 3072
    $region33: #{tpu_custom_call.1} parent=1 // pred_fallthru
      _
    %v81 = vld [vmem:[#allocation2] sm:$0xff]
    %v82 = vld [vmem:[#allocation2 + $0x8] sm:$0xff]
    %v83 = vld [vmem:[#allocation2 + $0x10] sm:$0xff]
    %v84 = vld [vmem:[#allocation2 + $0x18] sm:$0xff]
    %v85 = vld [vmem:[#allocation2 + $0x20] sm:$0xff]
    %v86 = vld [vmem:[#allocation2 + $0x28] sm:$0xff]
    %v87 = vld [vmem:[#allocation2 + $0x30] sm:$0xff]
    %v88 = vld [vmem:[#allocation2 + $0x38] sm:$0xff]
    %v89 = vld [vmem:[#allocation2 + $0x40] sm:$0xff]
    %v90 = vld [vmem:[#allocation2 + $0x48] sm:$0xff]
    %v91 = vld [vmem:[#allocation2 + $0x50] sm:$0xff]
    %v92 = vld [vmem:[#allocation2 + $0x58] sm:$0xff]
    %v93 = vld [vmem:[#allocation2 + $0x60] sm:$0xff]
    %v94 = vld [vmem:[#allocation2 + $0x68] sm:$0xff]
    %v95 = vld [vmem:[#allocation2 + $0x70] sm:$0xff]
    %v96 = vld [vmem:[#allocation2 + $0x78] sm:$0xff]
    %s97 = scalar_lea.vmem [#allocation2], 128
    %v98 = vld [vmem:[%s97] sm:$0xff]
    %v99 = vld [vmem:[%s97 + $0x8] sm:$0xff]
    %v100 = vld [vmem:[%s97 + $0x10] sm:$0xff]
    %v101 = vld [vmem:[%s97 + $0x18] sm:$0xff]
    %v102 = vld [vmem:[%s97 + $0x20] sm:$0xff]
    %v103 = vld [vmem:[%s97 + $0x28] sm:$0xff]
    %v104 = vld [vmem:[%s97 + $0x30] sm:$0xff]
    %v105 = vld [vmem:[%s97 + $0x38] sm:$0xff]
    %v106 = vld [vmem:[%s97 + $0x40] sm:$0xff]
    %v107 = vld [vmem:[%s97 + $0x48] sm:$0xff]
    %v108 = vld [vmem:[%s97 + $0x50] sm:$0xff]
    %v109 = vld [vmem:[%s97 + $0x58] sm:$0xff]
    %v110 = vld [vmem:[%s97 + $0x60] sm:$0xff]
    %v111 = vld [vmem:[%s97 + $0x68] sm:$0xff]
    %v112 = vld [vmem:[%s97 + $0x70] sm:$0xff]
    %v113 = vld [vmem:[%s97 + $0x78] sm:$0xff]
    %v114 = vld [vmem:[#allocation5] sm:$0xff]
    %v115 = vld [vmem:[#allocation5 + $0x8] sm:$0xff]
    %v116 = vld [vmem:[#allocation5 + $0x10] sm:$0xff]
    %v117 = vld [vmem:[#allocation5 + $0x18] sm:$0xff]
    %v118 = vld [vmem:[#allocation5 + $0x20] sm:$0xff]
    %v119 = vld [vmem:[#allocation5 + $0x28] sm:$0xff]
    %v120 = vld [vmem:[#allocation5 + $0x30] sm:$0xff]
    %v121 = vld [vmem:[#allocation5 + $0x38] sm:$0xff]
    %v122 = vld [vmem:[#allocation5 + $0x40] sm:$0xff]
    %v123 = vld [vmem:[#allocation5 + $0x48] sm:$0xff]
    %v124 = vld [vmem:[#allocation5 + $0x50] sm:$0xff]
    %v125 = vld [vmem:[#allocation5 + $0x58] sm:$0xff]
    %v126 = vld [vmem:[#allocation5 + $0x60] sm:$0xff]
    %v127 = vld [vmem:[#allocation5 + $0x68] sm:$0xff]
    %v128 = vld [vmem:[#allocation5 + $0x70] sm:$0xff]
    %v129 = vld [vmem:[#allocation5 + $0x78] sm:$0xff]
    %s130 = scalar_lea.vmem [#allocation5], 128
    %v131 = vld [vmem:[%s130] sm:$0xff]
    %v132 = vld [vmem:[%s130 + $0x8] sm:$0xff]
    %v133 = vld [vmem:[%s130 + $0x10] sm:$0xff]
    %v134 = vld [vmem:[%s130 + $0x18] sm:$0xff]
    %v135 = vld [vmem:[%s130 + $0x20] sm:$0xff]
    %v136 = vld [vmem:[%s130 + $0x28] sm:$0xff]
    %v137 = vld [vmem:[%s130 + $0x30] sm:$0xff]
    %v138 = vld [vmem:[%s130 + $0x38] sm:$0xff]
    %v139 = vld [vmem:[%s130 + $0x40] sm:$0xff]
    %v140 = vld [vmem:[%s130 + $0x48] sm:$0xff]
    %v141 = vld [vmem:[%s130 + $0x50] sm:$0xff]
    %v142 = vld [vmem:[%s130 + $0x58] sm:$0xff]
    %v143 = vld [vmem:[%s130 + $0x60] sm:$0xff]
    %v144 = vld [vmem:[%s130 + $0x68] sm:$0xff]
    %v145 = vld [vmem:[%s130 + $0x70] sm:$0xff]
    %v146 = vld [vmem:[%s130 + $0x78] sm:$0xff]
    %v147 = vmul.f32 %v81, %v114
    %v148 = vmul.f32 %v82, %v115
    %v149 = vmul.f32 %v83, %v116
    %v150 = vmul.f32 %v84, %v117
    %v151 = vmul.f32 %v85, %v118
    %v152 = vmul.f32 %v86, %v119
    %v153 = vmul.f32 %v87, %v120
    %v154 = vmul.f32 %v88, %v121
    %v155 = vmul.f32 %v89, %v122
    %v156 = vmul.f32 %v90, %v123
    %v157 = vmul.f32 %v91, %v124
    %v158 = vmul.f32 %v92, %v125
    %v159 = vmul.f32 %v93, %v126
    %v160 = vmul.f32 %v94, %v127
    %v161 = vmul.f32 %v95, %v128
    %v162 = vmul.f32 %v96, %v129
    %v163 = vmul.f32 %v98, %v131
    %v164 = vmul.f32 %v99, %v132
    %v165 = vmul.f32 %v100, %v133
    %v166 = vmul.f32 %v101, %v134
    %v167 = vmul.f32 %v102, %v135
    %v168 = vmul.f32 %v103, %v136
    %v169 = vmul.f32 %v104, %v137
    %v170 = vmul.f32 %v105, %v138
    %v171 = vmul.f32 %v106, %v139
    %v172 = vmul.f32 %v107, %v140
    %v173 = vmul.f32 %v108, %v141
    %v174 = vmul.f32 %v109, %v142
    %v175 = vmul.f32 %v110, %v143
    %v176 = vmul.f32 %v111, %v144
    %v177 = vmul.f32 %v112, %v145
    %v178 = vmul.f32 %v113, %v146
    %v179 = vsub.f32 %v147, %v163
    %v180 = vsub.f32 %v148, %v164
    %v181 = vsub.f32 %v149, %v165
    %v182 = vsub.f32 %v150, %v166
    %v183 = vsub.f32 %v151, %v167
    %v184 = vsub.f32 %v152, %v168
    %v185 = vsub.f32 %v153, %v169
    %v186 = vsub.f32 %v154, %v170
    %v187 = vsub.f32 %v155, %v171
    %v188 = vsub.f32 %v156, %v172
    %v189 = vsub.f32 %v157, %v173
    %v190 = vsub.f32 %v158, %v174
    %v191 = vsub.f32 %v159, %v175
    %v192 = vsub.f32 %v160, %v176
    %v193 = vsub.f32 %v161, %v177
    %v194 = vsub.f32 %v162, %v178
    %v195 = vmul.f32 %v81, %v131
    %v196 = vmul.f32 %v82, %v132
    %v197 = vmul.f32 %v83, %v133
    %v198 = vmul.f32 %v84, %v134
    %v199 = vmul.f32 %v85, %v135
    %v200 = vmul.f32 %v86, %v136
    %v201 = vmul.f32 %v87, %v137
    %v202 = vmul.f32 %v88, %v138
    %v203 = vmul.f32 %v89, %v139
    %v204 = vmul.f32 %v90, %v140
    %v205 = vmul.f32 %v91, %v141
    %v206 = vmul.f32 %v92, %v142
    %v207 = vmul.f32 %v93, %v143
    %v208 = vmul.f32 %v94, %v144
    %v209 = vmul.f32 %v95, %v145
    %v210 = vmul.f32 %v96, %v146
    %v211 = vmul.f32 %v98, %v114
    %v212 = vmul.f32 %v99, %v115
    %v213 = vmul.f32 %v100, %v116
    %v214 = vmul.f32 %v101, %v117
    %v215 = vmul.f32 %v102, %v118
    %v216 = vmul.f32 %v103, %v119
    %v217 = vmul.f32 %v104, %v120
    %v218 = vmul.f32 %v105, %v121
    %v219 = vmul.f32 %v106, %v122
    %v220 = vmul.f32 %v107, %v123
    %v221 = vmul.f32 %v108, %v124
    %v222 = vmul.f32 %v109, %v125
    %v223 = vmul.f32 %v110, %v126
    %v224 = vmul.f32 %v111, %v127
    %v225 = vmul.f32 %v112, %v128
    %v226 = vmul.f32 %v113, %v129
    %v227 = vadd.f32 %v195, %v211
    %v228 = vadd.f32 %v196, %v212
    %v229 = vadd.f32 %v197, %v213
    %v230 = vadd.f32 %v198, %v214
    %v231 = vadd.f32 %v199, %v215
    %v232 = vadd.f32 %v200, %v216
    %v233 = vadd.f32 %v201, %v217
    %v234 = vadd.f32 %v202, %v218
    %v235 = vadd.f32 %v203, %v219
    %v236 = vadd.f32 %v204, %v220
    %v237 = vadd.f32 %v205, %v221
    %v238 = vadd.f32 %v206, %v222
    %v239 = vadd.f32 %v207, %v223
    %v240 = vadd.f32 %v208, %v224
    %v241 = vadd.f32 %v209, %v225
    %v242 = vadd.f32 %v210, %v226
    %v243 = vpack.c.bf16 %v180, %v179
    %v244 = vpack.c.bf16 %v182, %v181
    %v245 = vpack.c.bf16 %v184, %v183
    %v246 = vpack.c.bf16 %v186, %v185
    %v247 = vpack.c.bf16 %v188, %v187
    %v248 = vpack.c.bf16 %v190, %v189
    %v249 = vpack.c.bf16 %v192, %v191
    %v250 = vpack.c.bf16 %v194, %v193
    %v251 = vpack.c.bf16 %v228, %v227
    %v252 = vpack.c.bf16 %v230, %v229
    %v253 = vpack.c.bf16 %v232, %v231
    %v254 = vpack.c.bf16 %v234, %v233
    %v255 = vpack.c.bf16 %v236, %v235
    %v256 = vpack.c.bf16 %v238, %v237
    %v257 = vpack.c.bf16 %v240, %v239
    %v258 = vpack.c.bf16 %v242, %v241
    %v259 = vadd.f32 %v179, %v227
    %v260 = vadd.f32 %v180, %v228
    %v261 = vadd.f32 %v181, %v229
    %v262 = vadd.f32 %v182, %v230
    %v263 = vadd.f32 %v183, %v231
    %v264 = vadd.f32 %v184, %v232
    %v265 = vadd.f32 %v185, %v233
    %v266 = vadd.f32 %v186, %v234
    %v267 = vadd.f32 %v187, %v235
    %v268 = vadd.f32 %v188, %v236
    %v269 = vadd.f32 %v189, %v237
    %v270 = vadd.f32 %v190, %v238
    %v271 = vadd.f32 %v191, %v239
    %v272 = vadd.f32 %v192, %v240
    %v273 = vadd.f32 %v193, %v241
    %v274 = vadd.f32 %v194, %v242
    %v275 = vpack.c.bf16 %v260, %v259
    %v276 = vpack.c.bf16 %v262, %v261
    %v277 = vpack.c.bf16 %v264, %v263
    %v278 = vpack.c.bf16 %v266, %v265
    %v279 = vpack.c.bf16 %v268, %v267
    %v280 = vpack.c.bf16 %v270, %v269
    %v281 = vpack.c.bf16 %v272, %v271
    %v282 = vpack.c.bf16 %v274, %v273
    %v283 = vld [vmem:[#allocation7] sm:$0xf]
    %v284 = vld [vmem:[#allocation7 + $0x4] sm:$0xf]
    %v285 = vld [vmem:[#allocation7 + $0x8] sm:$0xf]
    %v286 = vld [vmem:[#allocation7 + $0xc] sm:$0xf]
    %v287 = vld [vmem:[#allocation7 + $0x10] sm:$0xf]
    %v288 = vld [vmem:[#allocation7 + $0x14] sm:$0xf]
    %v289 = vld [vmem:[#allocation7 + $0x18] sm:$0xf]
    %v290 = vld [vmem:[#allocation7 + $0x1c] sm:$0xf]
    %v291 = vld [vmem:[#allocation7 + $0x20] sm:$0xf]
    %v292 = vld [vmem:[#allocation7 + $0x24] sm:$0xf]
    %v293 = vld [vmem:[#allocation7 + $0x28] sm:$0xf]
    %v294 = vld [vmem:[#allocation7 + $0x2c] sm:$0xf]
    %v295 = vld [vmem:[#allocation7 + $0x30] sm:$0xf]
    %v296 = vld [vmem:[#allocation7 + $0x34] sm:$0xf]
    %v297 = vld [vmem:[#allocation7 + $0x38] sm:$0xf]
    %v298 = vld [vmem:[#allocation7 + $0x3c] sm:$0xf]
    %v315 = vunpack.c.l.b16 %v283
    %v316 = vunpack.c.l.b16 %v284
    %v317 = vunpack.c.l.b16 %v285
    %v318 = vunpack.c.l.b16 %v286
    %v319 = vunpack.c.l.b16 %v287
    %v320 = vunpack.c.l.b16 %v288
    %v321 = vunpack.c.l.b16 %v289
    %v322 = vunpack.c.l.b16 %v290
    %v323 = vunpack.c.l.b16 %v291
    %v324 = vunpack.c.l.b16 %v292
    %v325 = vunpack.c.l.b16 %v293
    %v326 = vunpack.c.l.b16 %v294
    %v327 = vunpack.c.l.b16 %v295
    %v328 = vunpack.c.l.b16 %v296
    %v329 = vunpack.c.l.b16 %v297
    %v330 = vunpack.c.l.b16 %v298
    %v331 = vpack.c.b16 %v316, %v315
    %v332 = vpack.c.b16 %v318, %v317
    %v333 = vpack.c.b16 %v320, %v319
    %v334 = vpack.c.b16 %v322, %v321
    %v335 = vpack.c.b16 %v324, %v323
    %v336 = vpack.c.b16 %v326, %v325
    %v337 = vpack.c.b16 %v328, %v327
    %v338 = vpack.c.b16 %v330, %v329
    %347 = vmatpush.bf16.msra.mxu0 %v250
    %348 = vmatpush.bf16.msra.mxu0 %v249
    %349 = vmatpush.bf16.msra.mxu0 %v248
    %350 = vmatpush.bf16.msra.mxu0 %v247
    %351 = vmatpush.bf16.msra.mxu0 %v246
    %352 = vmatpush.bf16.msra.mxu0 %v245
    %353 = vmatpush.bf16.msra.mxu0 %v244
    %354 = vmatpush.bf16.msra.mxu0 %v243
    %355 = vmatmul.bf16.gmra.mxu0 %v331
    %v356 = vpop.f32.mrf.mxu0
    %v357 = vadd.f32 0.0, %v356
    %v358 = vpop.f32.mrf.mxu0
    %v359 = vadd.f32 0.0, %v358
    %360 = vmatmul.bf16.gmra.mxu0 %v332
    %v361 = vpop.f32.mrf.mxu0
    %v362 = vadd.f32 0.0, %v361
    %v363 = vpop.f32.mrf.mxu0
    %v364 = vadd.f32 0.0, %v363
    %365 = vmatmul.bf16.gmra.mxu0 %v333
    %v366 = vpop.f32.mrf.mxu0
    %v367 = vadd.f32 0.0, %v366
    %v368 = vpop.f32.mrf.mxu0
    %v369 = vadd.f32 0.0, %v368
    %370 = vmatmul.bf16.gmra.mxu0 %v334
    %v371 = vpop.f32.mrf.mxu0
    %v372 = vadd.f32 0.0, %v371
    %v373 = vpop.f32.mrf.mxu0
    %v374 = vadd.f32 0.0, %v373
    %375 = vmatmul.bf16.gmra.mxu0 %v335
    %v376 = vpop.f32.mrf.mxu0
    %v377 = vadd.f32 0.0, %v376
    %v378 = vpop.f32.mrf.mxu0
    %v379 = vadd.f32 0.0, %v378
    %380 = vmatmul.bf16.gmra.mxu0 %v336
    %v381 = vpop.f32.mrf.mxu0
    %v382 = vadd.f32 0.0, %v381
    %v383 = vpop.f32.mrf.mxu0
    %v384 = vadd.f32 0.0, %v383
    %385 = vmatmul.bf16.gmra.mxu0 %v337
    %v386 = vpop.f32.mrf.mxu0
    %v387 = vadd.f32 0.0, %v386
    %v388 = vpop.f32.mrf.mxu0
    %v389 = vadd.f32 0.0, %v388
    %390 = vmatmul.bf16.gmra.mxu0 %v338
    %v391 = vpop.f32.mrf.mxu0
    %v392 = vadd.f32 0.0, %v391
    %v393 = vpop.f32.mrf.mxu0
    %v394 = vadd.f32 0.0, %v393
    %395 = vdwg.mxu0
    %s396 = scalar_lea.vmem [#allocation7], 64
    %v397 = vld [vmem:[%s396] sm:$0xf]
    %v398 = vld [vmem:[%s396 + $0x4] sm:$0xf]
    %v399 = vld [vmem:[%s396 + $0x8] sm:$0xf]
    %v400 = vld [vmem:[%s396 + $0xc] sm:$0xf]
    %v401 = vld [vmem:[%s396 + $0x10] sm:$0xf]
    %v402 = vld [vmem:[%s396 + $0x14] sm:$0xf]
    %v403 = vld [vmem:[%s396 + $0x18] sm:$0xf]
    %v404 = vld [vmem:[%s396 + $0x1c] sm:$0xf]
    %v405 = vld [vmem:[%s396 + $0x20] sm:$0xf]
    %v406 = vld [vmem:[%s396 + $0x24] sm:$0xf]
    %v407 = vld [vmem:[%s396 + $0x28] sm:$0xf]
    %v408 = vld [vmem:[%s396 + $0x2c] sm:$0xf]
    %v409 = vld [vmem:[%s396 + $0x30] sm:$0xf]
    %v410 = vld [vmem:[%s396 + $0x34] sm:$0xf]
    %v411 = vld [vmem:[%s396 + $0x38] sm:$0xf]
    %v412 = vld [vmem:[%s396 + $0x3c] sm:$0xf]
    %v429 = vunpack.c.l.b16 %v397
    %v430 = vunpack.c.l.b16 %v398
    %v431 = vunpack.c.l.b16 %v399
    %v432 = vunpack.c.l.b16 %v400
    %v433 = vunpack.c.l.b16 %v401
    %v434 = vunpack.c.l.b16 %v402
    %v435 = vunpack.c.l.b16 %v403
    %v436 = vunpack.c.l.b16 %v404
    %v437 = vunpack.c.l.b16 %v405
    %v438 = vunpack.c.l.b16 %v406
    %v439 = vunpack.c.l.b16 %v407
    %v440 = vunpack.c.l.b16 %v408
    %v441 = vunpack.c.l.b16 %v409
    %v442 = vunpack.c.l.b16 %v410
    %v443 = vunpack.c.l.b16 %v411
    %v444 = vunpack.c.l.b16 %v412
    %v445 = vpack.c.b16 %v430, %v429
    %v446 = vpack.c.b16 %v432, %v431
    %v447 = vpack.c.b16 %v434, %v433
    %v448 = vpack.c.b16 %v436, %v435
    %v449 = vpack.c.b16 %v438, %v437
    %v450 = vpack.c.b16 %v440, %v439
    %v451 = vpack.c.b16 %v442, %v441
    %v452 = vpack.c.b16 %v444, %v443
    %461 = vmatpush.bf16.msra.mxu0 %v258
    %462 = vmatpush.bf16.msra.mxu0 %v257
    %463 = vmatpush.bf16.msra.mxu0 %v256
    %464 = vmatpush.bf16.msra.mxu0 %v255
    %465 = vmatpush.bf16.msra.mxu0 %v254
    %466 = vmatpush.bf16.msra.mxu0 %v253
    %467 = vmatpush.bf16.msra.mxu0 %v252
    %468 = vmatpush.bf16.msra.mxu0 %v251
    %469 = vmatmul.bf16.gmra.mxu0 %v445
    %v470 = vpop.f32.mrf.mxu0
    %v471 = vadd.f32 0.0, %v470
    %v472 = vpop.f32.mrf.mxu0
    %v473 = vadd.f32 0.0, %v472
    %474 = vmatmul.bf16.gmra.mxu0 %v446
    %v475 = vpop.f32.mrf.mxu0
    %v476 = vadd.f32 0.0, %v475
    %v477 = vpop.f32.mrf.mxu0
    %v478 = vadd.f32 0.0, %v477
    %479 = vmatmul.bf16.gmra.mxu0 %v447
    %v480 = vpop.f32.mrf.mxu0
    %v481 = vadd.f32 0.0, %v480
    %v482 = vpop.f32.mrf.mxu0
    %v483 = vadd.f32 0.0, %v482
    %484 = vmatmul.bf16.gmra.mxu0 %v448
    %v485 = vpop.f32.mrf.mxu0
    %v486 = vadd.f32 0.0, %v485
    %v487 = vpop.f32.mrf.mxu0
    %v488 = vadd.f32 0.0, %v487
    %489 = vmatmul.bf16.gmra.mxu0 %v449
    %v490 = vpop.f32.mrf.mxu0
    %v491 = vadd.f32 0.0, %v490
    %v492 = vpop.f32.mrf.mxu0
    %v493 = vadd.f32 0.0, %v492
    %494 = vmatmul.bf16.gmra.mxu0 %v450
    %v495 = vpop.f32.mrf.mxu0
    %v496 = vadd.f32 0.0, %v495
    %v497 = vpop.f32.mrf.mxu0
    %v498 = vadd.f32 0.0, %v497
    %499 = vmatmul.bf16.gmra.mxu0 %v451
    %v500 = vpop.f32.mrf.mxu0
    %v501 = vadd.f32 0.0, %v500
    %v502 = vpop.f32.mrf.mxu0
    %v503 = vadd.f32 0.0, %v502
    %504 = vmatmul.bf16.gmra.mxu0 %v452
    %v505 = vpop.f32.mrf.mxu0
    %v506 = vadd.f32 0.0, %v505
    %v507 = vpop.f32.mrf.mxu0
    %v508 = vadd.f32 0.0, %v507
    %509 = vdwg.mxu0
    %s510 = scalar_lea.vmem [#allocation7], 128
    %v511 = vld [vmem:[%s510] sm:$0xf]
    %v512 = vld [vmem:[%s510 + $0x4] sm:$0xf]
    %v513 = vld [vmem:[%s510 + $0x8] sm:$0xf]
    %v514 = vld [vmem:[%s510 + $0xc] sm:$0xf]
    %v515 = vld [vmem:[%s510 + $0x10] sm:$0xf]
    %v516 = vld [vmem:[%s510 + $0x14] sm:$0xf]
    %v517 = vld [vmem:[%s510 + $0x18] sm:$0xf]
    %v518 = vld [vmem:[%s510 + $0x1c] sm:$0xf]
    %v519 = vld [vmem:[%s510 + $0x20] sm:$0xf]
    %v520 = vld [vmem:[%s510 + $0x24] sm:$0xf]
    %v521 = vld [vmem:[%s510 + $0x28] sm:$0xf]
    %v522 = vld [vmem:[%s510 + $0x2c] sm:$0xf]
    %v523 = vld [vmem:[%s510 + $0x30] sm:$0xf]
    %v524 = vld [vmem:[%s510 + $0x34] sm:$0xf]
    %v525 = vld [vmem:[%s510 + $0x38] sm:$0xf]
    %v526 = vld [vmem:[%s510 + $0x3c] sm:$0xf]
    %v543 = vunpack.c.l.b16 %v511
    %v544 = vunpack.c.l.b16 %v512
    %v545 = vunpack.c.l.b16 %v513
    %v546 = vunpack.c.l.b16 %v514
    %v547 = vunpack.c.l.b16 %v515
    %v548 = vunpack.c.l.b16 %v516
    %v549 = vunpack.c.l.b16 %v517
    %v550 = vunpack.c.l.b16 %v518
    %v551 = vunpack.c.l.b16 %v519
    %v552 = vunpack.c.l.b16 %v520
    %v553 = vunpack.c.l.b16 %v521
    %v554 = vunpack.c.l.b16 %v522
    %v555 = vunpack.c.l.b16 %v523
    %v556 = vunpack.c.l.b16 %v524
    %v557 = vunpack.c.l.b16 %v525
    %v558 = vunpack.c.l.b16 %v526
    %v559 = vpack.c.b16 %v544, %v543
    %v560 = vpack.c.b16 %v546, %v545
    %v561 = vpack.c.b16 %v548, %v547
    %v562 = vpack.c.b16 %v550, %v549
    %v563 = vpack.c.b16 %v552, %v551
    %v564 = vpack.c.b16 %v554, %v553
    %v565 = vpack.c.b16 %v556, %v555
    %v566 = vpack.c.b16 %v558, %v557
    %575 = vmatpush.bf16.msra.mxu0 %v282
    %576 = vmatpush.bf16.msra.mxu0 %v281
    %577 = vmatpush.bf16.msra.mxu0 %v280
    %578 = vmatpush.bf16.msra.mxu0 %v279
    %579 = vmatpush.bf16.msra.mxu0 %v278
    %580 = vmatpush.bf16.msra.mxu0 %v277
    %581 = vmatpush.bf16.msra.mxu0 %v276
    %582 = vmatpush.bf16.msra.mxu0 %v275
    %583 = vmatmul.bf16.gmra.mxu0 %v559
    %v584 = vpop.f32.mrf.mxu0
    %v585 = vadd.f32 0.0, %v584
    %v586 = vpop.f32.mrf.mxu0
    %v587 = vadd.f32 0.0, %v586
    %588 = vmatmul.bf16.gmra.mxu0 %v560
    %v589 = vpop.f32.mrf.mxu0
    %v590 = vadd.f32 0.0, %v589
    %v591 = vpop.f32.mrf.mxu0
    %v592 = vadd.f32 0.0, %v591
    %593 = vmatmul.bf16.gmra.mxu0 %v561
    %v594 = vpop.f32.mrf.mxu0
    %v595 = vadd.f32 0.0, %v594
    %v596 = vpop.f32.mrf.mxu0
    %v597 = vadd.f32 0.0, %v596
    %598 = vmatmul.bf16.gmra.mxu0 %v562
    %v599 = vpop.f32.mrf.mxu0
    %v600 = vadd.f32 0.0, %v599
    %v601 = vpop.f32.mrf.mxu0
    %v602 = vadd.f32 0.0, %v601
    %603 = vmatmul.bf16.gmra.mxu0 %v563
    %v604 = vpop.f32.mrf.mxu0
    %v605 = vadd.f32 0.0, %v604
    %v606 = vpop.f32.mrf.mxu0
    %v607 = vadd.f32 0.0, %v606
    %608 = vmatmul.bf16.gmra.mxu0 %v564
    %v609 = vpop.f32.mrf.mxu0
    %v610 = vadd.f32 0.0, %v609
    %v611 = vpop.f32.mrf.mxu0
    %v612 = vadd.f32 0.0, %v611
    %613 = vmatmul.bf16.gmra.mxu0 %v565
    %v614 = vpop.f32.mrf.mxu0
    %v615 = vadd.f32 0.0, %v614
    %v616 = vpop.f32.mrf.mxu0
    %v617 = vadd.f32 0.0, %v616
    %618 = vmatmul.bf16.gmra.mxu0 %v566
    %v619 = vpop.f32.mrf.mxu0
    %v620 = vadd.f32 0.0, %v619
    %v621 = vpop.f32.mrf.mxu0
    %v622 = vadd.f32 0.0, %v621
    %623 = vdwg.mxu0
    %v624 = vsub.f32 %v357, %v471
    %v625 = vsub.f32 %v359, %v473
    %v626 = vsub.f32 %v362, %v476
    %v627 = vsub.f32 %v364, %v478
    %v628 = vsub.f32 %v367, %v481
    %v629 = vsub.f32 %v369, %v483
    %v630 = vsub.f32 %v372, %v486
    %v631 = vsub.f32 %v374, %v488
    %v632 = vsub.f32 %v377, %v491
    %v633 = vsub.f32 %v379, %v493
    %v634 = vsub.f32 %v382, %v496
    %v635 = vsub.f32 %v384, %v498
    %v636 = vsub.f32 %v387, %v501
    %v637 = vsub.f32 %v389, %v503
    %v638 = vsub.f32 %v392, %v506
    %v639 = vsub.f32 %v394, %v508
    %v640 = vsub.f32 %v585, %v357
    %v641 = vsub.f32 %v587, %v359
    %v642 = vsub.f32 %v590, %v362
    %v643 = vsub.f32 %v592, %v364
    %v644 = vsub.f32 %v595, %v367
    %v645 = vsub.f32 %v597, %v369
    %v646 = vsub.f32 %v600, %v372
    %v647 = vsub.f32 %v602, %v374
    %v648 = vsub.f32 %v605, %v377
    %v649 = vsub.f32 %v607, %v379
    %v650 = vsub.f32 %v610, %v382
    %v651 = vsub.f32 %v612, %v384
    %v652 = vsub.f32 %v615, %v387
    %v653 = vsub.f32 %v617, %v389
    %v654 = vsub.f32 %v620, %v392
    %v655 = vsub.f32 %v622, %v394
    %v656 = vsub.f32 %v640, %v471
    %v657 = vsub.f32 %v641, %v473
    %v658 = vsub.f32 %v642, %v476
    %v659 = vsub.f32 %v643, %v478
    %v660 = vsub.f32 %v644, %v481
    %v661 = vsub.f32 %v645, %v483
    %v662 = vsub.f32 %v646, %v486
    %v663 = vsub.f32 %v647, %v488
    %v664 = vsub.f32 %v648, %v491
    %v665 = vsub.f32 %v649, %v493
    %v666 = vsub.f32 %v650, %v496
    %v667 = vsub.f32 %v651, %v498
    %v668 = vsub.f32 %v652, %v501
    %v669 = vsub.f32 %v653, %v503
    %v670 = vsub.f32 %v654, %v506
    %v671 = vsub.f32 %v655, %v508
    %v672 = vpack.c.bf16 %v625, %v624
    %v673 = vpack.c.bf16 %v627, %v626
    %v674 = vpack.c.bf16 %v629, %v628
    %v675 = vpack.c.bf16 %v631, %v630
    %v676 = vpack.c.bf16 %v633, %v632
    %v677 = vpack.c.bf16 %v635, %v634
    %v678 = vpack.c.bf16 %v637, %v636
    %v679 = vpack.c.bf16 %v639, %v638
    %v680 = vpack.c.bf16 %v657, %v656
    %v681 = vpack.c.bf16 %v659, %v658
    %v682 = vpack.c.bf16 %v661, %v660
    %v683 = vpack.c.bf16 %v663, %v662
    %v684 = vpack.c.bf16 %v665, %v664
    %v685 = vpack.c.bf16 %v667, %v666
    %v686 = vpack.c.bf16 %v669, %v668
    %v687 = vpack.c.bf16 %v671, %v670
    %v688 = vadd.f32 %v624, %v656
    %v689 = vadd.f32 %v625, %v657
    %v690 = vadd.f32 %v626, %v658
    %v691 = vadd.f32 %v627, %v659
    %v692 = vadd.f32 %v628, %v660
    %v693 = vadd.f32 %v629, %v661
    %v694 = vadd.f32 %v630, %v662
    %v695 = vadd.f32 %v631, %v663
    %v696 = vadd.f32 %v632, %v664
    %v697 = vadd.f32 %v633, %v665
    %v698 = vadd.f32 %v634, %v666
    %v699 = vadd.f32 %v635, %v667
    %v700 = vadd.f32 %v636, %v668
    %v701 = vadd.f32 %v637, %v669
    %v702 = vadd.f32 %v638, %v670
    %v703 = vadd.f32 %v639, %v671
    %v704 = vpack.c.bf16 %v689, %v688
    %v705 = vpack.c.bf16 %v691, %v690
    %v706 = vpack.c.bf16 %v693, %v692
    %v707 = vpack.c.bf16 %v695, %v694
    %v708 = vpack.c.bf16 %v697, %v696
    %v709 = vpack.c.bf16 %v699, %v698
    %v710 = vpack.c.bf16 %v701, %v700
    %v711 = vpack.c.bf16 %v703, %v702
    %v712 = vld [vmem:[#allocation8] sm:$0xf]
    %v713 = vld [vmem:[#allocation8 + $0x4] sm:$0xf]
    %v714 = vld [vmem:[#allocation8 + $0x8] sm:$0xf]
    %v715 = vld [vmem:[#allocation8 + $0xc] sm:$0xf]
    %v716 = vld [vmem:[#allocation8 + $0x10] sm:$0xf]
    %v717 = vld [vmem:[#allocation8 + $0x14] sm:$0xf]
    %v718 = vld [vmem:[#allocation8 + $0x18] sm:$0xf]
    %v719 = vld [vmem:[#allocation8 + $0x1c] sm:$0xf]
    %v720 = vld [vmem:[#allocation8 + $0x20] sm:$0xf]
    %v721 = vld [vmem:[#allocation8 + $0x24] sm:$0xf]
    %v722 = vld [vmem:[#allocation8 + $0x28] sm:$0xf]
    %v723 = vld [vmem:[#allocation8 + $0x2c] sm:$0xf]
    %v724 = vld [vmem:[#allocation8 + $0x30] sm:$0xf]
    %v725 = vld [vmem:[#allocation8 + $0x34] sm:$0xf]
    %v726 = vld [vmem:[#allocation8 + $0x38] sm:$0xf]
    %v727 = vld [vmem:[#allocation8 + $0x3c] sm:$0xf]
    %v744 = vunpack.c.l.b16 %v712
    %v745 = vunpack.c.l.b16 %v713
    %v746 = vunpack.c.l.b16 %v714
    %v747 = vunpack.c.l.b16 %v715
    %v748 = vunpack.c.l.b16 %v716
    %v749 = vunpack.c.l.b16 %v717
    %v750 = vunpack.c.l.b16 %v718
    %v751 = vunpack.c.l.b16 %v719
    %v752 = vunpack.c.l.b16 %v720
    %v753 = vunpack.c.l.b16 %v721
    %v754 = vunpack.c.l.b16 %v722
    %v755 = vunpack.c.l.b16 %v723
    %v756 = vunpack.c.l.b16 %v724
    %v757 = vunpack.c.l.b16 %v725
    %v758 = vunpack.c.l.b16 %v726
    %v759 = vunpack.c.l.b16 %v727
    %v760 = vpack.c.b16 %v745, %v744
    %v761 = vpack.c.b16 %v747, %v746
    %v762 = vpack.c.b16 %v749, %v748
    %v763 = vpack.c.b16 %v751, %v750
    %v764 = vpack.c.b16 %v753, %v752
    %v765 = vpack.c.b16 %v755, %v754
    %v766 = vpack.c.b16 %v757, %v756
    %v767 = vpack.c.b16 %v759, %v758
    %776 = vmatpush.bf16.msra.mxu0 %v767
    %777 = vmatpush.bf16.msra.mxu0 %v766
    %778 = vmatpush.bf16.msra.mxu0 %v765
    %779 = vmatpush.bf16.msra.mxu0 %v764
    %780 = vmatpush.bf16.msra.mxu0 %v763
    %781 = vmatpush.bf16.msra.mxu0 %v762
    %782 = vmatpush.bf16.msra.mxu0 %v761
    %783 = vmatpush.bf16.msra.mxu0 %v760
    %784 = vmatmul.bf16.gmra.mxu0 %v672
    %v785 = vpop.f32.mrf.mxu0
    %v786 = vadd.f32 0.0, %v785
    %v787 = vpop.f32.mrf.mxu0
    %v788 = vadd.f32 0.0, %v787
    %789 = vmatmul.bf16.gmra.mxu0 %v673
    %v790 = vpop.f32.mrf.mxu0
    %v791 = vadd.f32 0.0, %v790
    %v792 = vpop.f32.mrf.mxu0
    %v793 = vadd.f32 0.0, %v792
    %794 = vmatmul.bf16.gmra.mxu0 %v674
    %v795 = vpop.f32.mrf.mxu0
    %v796 = vadd.f32 0.0, %v795
    %v797 = vpop.f32.mrf.mxu0
    %v798 = vadd.f32 0.0, %v797
    %799 = vmatmul.bf16.gmra.mxu0 %v675
    %v800 = vpop.f32.mrf.mxu0
    %v801 = vadd.f32 0.0, %v800
    %v802 = vpop.f32.mrf.mxu0
    %v803 = vadd.f32 0.0, %v802
    %804 = vmatmul.bf16.gmra.mxu0 %v676
    %v805 = vpop.f32.mrf.mxu0
    %v806 = vadd.f32 0.0, %v805
    %v807 = vpop.f32.mrf.mxu0
    %v808 = vadd.f32 0.0, %v807
    %809 = vmatmul.bf16.gmra.mxu0 %v677
    %v810 = vpop.f32.mrf.mxu0
    %v811 = vadd.f32 0.0, %v810
    %v812 = vpop.f32.mrf.mxu0
    %v813 = vadd.f32 0.0, %v812
    %814 = vmatmul.bf16.gmra.mxu0 %v678
    %v815 = vpop.f32.mrf.mxu0
    %v816 = vadd.f32 0.0, %v815
    %v817 = vpop.f32.mrf.mxu0
    %v818 = vadd.f32 0.0, %v817
    %819 = vmatmul.bf16.gmra.mxu0 %v679
    %v820 = vpop.f32.mrf.mxu0
    %v821 = vadd.f32 0.0, %v820
    %v822 = vpop.f32.mrf.mxu0
    %v823 = vadd.f32 0.0, %v822
    %824 = vdwg.mxu0
    %s825 = scalar_lea.vmem [#allocation8], 64
    %v826 = vld [vmem:[%s825] sm:$0xf]
    %v827 = vld [vmem:[%s825 + $0x4] sm:$0xf]
    %v828 = vld [vmem:[%s825 + $0x8] sm:$0xf]
    %v829 = vld [vmem:[%s825 + $0xc] sm:$0xf]
    %v830 = vld [vmem:[%s825 + $0x10] sm:$0xf]
    %v831 = vld [vmem:[%s825 + $0x14] sm:$0xf]
    %v832 = vld [vmem:[%s825 + $0x18] sm:$0xf]
    %v833 = vld [vmem:[%s825 + $0x1c] sm:$0xf]
    %v834 = vld [vmem:[%s825 + $0x20] sm:$0xf]
    %v835 = vld [vmem:[%s825 + $0x24] sm:$0xf]
    %v836 = vld [vmem:[%s825 + $0x28] sm:$0xf]
    %v837 = vld [vmem:[%s825 + $0x2c] sm:$0xf]
    %v838 = vld [vmem:[%s825 + $0x30] sm:$0xf]
    %v839 = vld [vmem:[%s825 + $0x34] sm:$0xf]
    %v840 = vld [vmem:[%s825 + $0x38] sm:$0xf]
    %v841 = vld [vmem:[%s825 + $0x3c] sm:$0xf]
    %v858 = vunpack.c.l.b16 %v826
    %v859 = vunpack.c.l.b16 %v827
    %v860 = vunpack.c.l.b16 %v828
    %v861 = vunpack.c.l.b16 %v829
    %v862 = vunpack.c.l.b16 %v830
    %v863 = vunpack.c.l.b16 %v831
    %v864 = vunpack.c.l.b16 %v832
    %v865 = vunpack.c.l.b16 %v833
    %v866 = vunpack.c.l.b16 %v834
    %v867 = vunpack.c.l.b16 %v835
    %v868 = vunpack.c.l.b16 %v836
    %v869 = vunpack.c.l.b16 %v837
    %v870 = vunpack.c.l.b16 %v838
    %v871 = vunpack.c.l.b16 %v839
    %v872 = vunpack.c.l.b16 %v840
    %v873 = vunpack.c.l.b16 %v841
    %v874 = vpack.c.b16 %v859, %v858
    %v875 = vpack.c.b16 %v861, %v860
    %v876 = vpack.c.b16 %v863, %v862
    %v877 = vpack.c.b16 %v865, %v864
    %v878 = vpack.c.b16 %v867, %v866
    %v879 = vpack.c.b16 %v869, %v868
    %v880 = vpack.c.b16 %v871, %v870
    %v881 = vpack.c.b16 %v873, %v872
    %890 = vmatpush.bf16.msra.mxu0 %v881
    %891 = vmatpush.bf16.msra.mxu0 %v880
    %892 = vmatpush.bf16.msra.mxu0 %v879
    %893 = vmatpush.bf16.msra.mxu0 %v878
    %894 = vmatpush.bf16.msra.mxu0 %v877
    %895 = vmatpush.bf16.msra.mxu0 %v876
    %896 = vmatpush.bf16.msra.mxu0 %v875
    %897 = vmatpush.bf16.msra.mxu0 %v874
    %898 = vmatmul.bf16.gmra.mxu0 %v680
    %v899 = vpop.f32.mrf.mxu0
    %v900 = vadd.f32 0.0, %v899
    %v901 = vpop.f32.mrf.mxu0
    %v902 = vadd.f32 0.0, %v901
    %903 = vmatmul.bf16.gmra.mxu0 %v681
    %v904 = vpop.f32.mrf.mxu0
    %v905 = vadd.f32 0.0, %v904
    %v906 = vpop.f32.mrf.mxu0
    %v907 = vadd.f32 0.0, %v906
    %908 = vmatmul.bf16.gmra.mxu0 %v682
    %v909 = vpop.f32.mrf.mxu0
    %v910 = vadd.f32 0.0, %v909
    %v911 = vpop.f32.mrf.mxu0
    %v912 = vadd.f32 0.0, %v911
    %913 = vmatmul.bf16.gmra.mxu0 %v683
    %v914 = vpop.f32.mrf.mxu0
    %v915 = vadd.f32 0.0, %v914
    %v916 = vpop.f32.mrf.mxu0
    %v917 = vadd.f32 0.0, %v916
    %918 = vmatmul.bf16.gmra.mxu0 %v684
    %v919 = vpop.f32.mrf.mxu0
    %v920 = vadd.f32 0.0, %v919
    %v921 = vpop.f32.mrf.mxu0
    %v922 = vadd.f32 0.0, %v921
    %923 = vmatmul.bf16.gmra.mxu0 %v685
    %v924 = vpop.f32.mrf.mxu0
    %v925 = vadd.f32 0.0, %v924
    %v926 = vpop.f32.mrf.mxu0
    %v927 = vadd.f32 0.0, %v926
    %928 = vmatmul.bf16.gmra.mxu0 %v686
    %v929 = vpop.f32.mrf.mxu0
    %v930 = vadd.f32 0.0, %v929
    %v931 = vpop.f32.mrf.mxu0
    %v932 = vadd.f32 0.0, %v931
    %933 = vmatmul.bf16.gmra.mxu0 %v687
    %v934 = vpop.f32.mrf.mxu0
    %v935 = vadd.f32 0.0, %v934
    %v936 = vpop.f32.mrf.mxu0
    %v937 = vadd.f32 0.0, %v936
    %938 = vdwg.mxu0
    %s939 = scalar_lea.vmem [#allocation8], 128
    %v940 = vld [vmem:[%s939] sm:$0xf]
    %v941 = vld [vmem:[%s939 + $0x4] sm:$0xf]
    %v942 = vld [vmem:[%s939 + $0x8] sm:$0xf]
    %v943 = vld [vmem:[%s939 + $0xc] sm:$0xf]
    %v944 = vld [vmem:[%s939 + $0x10] sm:$0xf]
    %v945 = vld [vmem:[%s939 + $0x14] sm:$0xf]
    %v946 = vld [vmem:[%s939 + $0x18] sm:$0xf]
    %v947 = vld [vmem:[%s939 + $0x1c] sm:$0xf]
    %v948 = vld [vmem:[%s939 + $0x20] sm:$0xf]
    %v949 = vld [vmem:[%s939 + $0x24] sm:$0xf]
    %v950 = vld [vmem:[%s939 + $0x28] sm:$0xf]
    %v951 = vld [vmem:[%s939 + $0x2c] sm:$0xf]
    %v952 = vld [vmem:[%s939 + $0x30] sm:$0xf]
    %v953 = vld [vmem:[%s939 + $0x34] sm:$0xf]
    %v954 = vld [vmem:[%s939 + $0x38] sm:$0xf]
    %v955 = vld [vmem:[%s939 + $0x3c] sm:$0xf]
    %v972 = vunpack.c.l.b16 %v940
    %v973 = vunpack.c.l.b16 %v941
    %v974 = vunpack.c.l.b16 %v942
    %v975 = vunpack.c.l.b16 %v943
    %v976 = vunpack.c.l.b16 %v944
    %v977 = vunpack.c.l.b16 %v945
    %v978 = vunpack.c.l.b16 %v946
    %v979 = vunpack.c.l.b16 %v947
    %v980 = vunpack.c.l.b16 %v948
    %v981 = vunpack.c.l.b16 %v949
    %v982 = vunpack.c.l.b16 %v950
    %v983 = vunpack.c.l.b16 %v951
    %v984 = vunpack.c.l.b16 %v952
    %v985 = vunpack.c.l.b16 %v953
    %v986 = vunpack.c.l.b16 %v954
    %v987 = vunpack.c.l.b16 %v955
    %v988 = vpack.c.b16 %v973, %v972
    %v989 = vpack.c.b16 %v975, %v974
    %v990 = vpack.c.b16 %v977, %v976
    %v991 = vpack.c.b16 %v979, %v978
    %v992 = vpack.c.b16 %v981, %v980
    %v993 = vpack.c.b16 %v983, %v982
    %v994 = vpack.c.b16 %v985, %v984
    %v995 = vpack.c.b16 %v987, %v986
    %1004 = vmatpush.bf16.msra.mxu0 %v995
    %1005 = vmatpush.bf16.msra.mxu0 %v994
    %1006 = vmatpush.bf16.msra.mxu0 %v993
    %1007 = vmatpush.bf16.msra.mxu0 %v992
    %1008 = vmatpush.bf16.msra.mxu0 %v991
    %1009 = vmatpush.bf16.msra.mxu0 %v990
    %1010 = vmatpush.bf16.msra.mxu0 %v989
    %1011 = vmatpush.bf16.msra.mxu0 %v988
    %1012 = vmatmul.bf16.gmra.mxu0 %v704
    %v1013 = vpop.f32.mrf.mxu0
    %v1014 = vadd.f32 0.0, %v1013
    %v1015 = vpop.f32.mrf.mxu0
    %v1016 = vadd.f32 0.0, %v1015
    %1017 = vmatmul.bf16.gmra.mxu0 %v705
    %v1018 = vpop.f32.mrf.mxu0
    %v1019 = vadd.f32 0.0, %v1018
    %v1020 = vpop.f32.mrf.mxu0
    %v1021 = vadd.f32 0.0, %v1020
    %1022 = vmatmul.bf16.gmra.mxu0 %v706
    %v1023 = vpop.f32.mrf.mxu0
    %v1024 = vadd.f32 0.0, %v1023
    %v1025 = vpop.f32.mrf.mxu0
    %v1026 = vadd.f32 0.0, %v1025
    %1027 = vmatmul.bf16.gmra.mxu0 %v707
    %v1028 = vpop.f32.mrf.mxu0
    %v1029 = vadd.f32 0.0, %v1028
    %v1030 = vpop.f32.mrf.mxu0
    %v1031 = vadd.f32 0.0, %v1030
    %1032 = vmatmul.bf16.gmra.mxu0 %v708
    %v1033 = vpop.f32.mrf.mxu0
    %v1034 = vadd.f32 0.0, %v1033
    %v1035 = vpop.f32.mrf.mxu0
    %v1036 = vadd.f32 0.0, %v1035
    %1037 = vmatmul.bf16.gmra.mxu0 %v709
    %v1038 = vpop.f32.mrf.mxu0
    %v1039 = vadd.f32 0.0, %v1038
    %v1040 = vpop.f32.mrf.mxu0
    %v1041 = vadd.f32 0.0, %v1040
    %1042 = vmatmul.bf16.gmra.mxu0 %v710
    %v1043 = vpop.f32.mrf.mxu0
    %v1044 = vadd.f32 0.0, %v1043
    %v1045 = vpop.f32.mrf.mxu0
    %v1046 = vadd.f32 0.0, %v1045
    %1047 = vmatmul.bf16.gmra.mxu0 %v711
    %v1048 = vpop.f32.mrf.mxu0
    %v1049 = vadd.f32 0.0, %v1048
    %v1050 = vpop.f32.mrf.mxu0
    %v1051 = vadd.f32 0.0, %v1050
    %1052 = vdwg.mxu0
    %v1053 = vsub.f32 %v786, %v900
    %v1054 = vsub.f32 %v788, %v902
    %v1055 = vsub.f32 %v791, %v905
    %v1056 = vsub.f32 %v793, %v907
    %v1057 = vsub.f32 %v796, %v910
    %v1058 = vsub.f32 %v798, %v912
    %v1059 = vsub.f32 %v801, %v915
    %v1060 = vsub.f32 %v803, %v917
    %v1061 = vsub.f32 %v806, %v920
    %v1062 = vsub.f32 %v808, %v922
    %v1063 = vsub.f32 %v811, %v925
    %v1064 = vsub.f32 %v813, %v927
    %v1065 = vsub.f32 %v816, %v930
    %v1066 = vsub.f32 %v818, %v932
    %v1067 = vsub.f32 %v821, %v935
    %v1068 = vsub.f32 %v823, %v937
    %v1069 = vsub.f32 %v1014, %v786
    %v1070 = vsub.f32 %v1016, %v788
    %v1071 = vsub.f32 %v1019, %v791
    %v1072 = vsub.f32 %v1021, %v793
    %v1073 = vsub.f32 %v1024, %v796
    %v1074 = vsub.f32 %v1026, %v798
    %v1075 = vsub.f32 %v1029, %v801
    %v1076 = vsub.f32 %v1031, %v803
    %v1077 = vsub.f32 %v1034, %v806
    %v1078 = vsub.f32 %v1036, %v808
    %v1079 = vsub.f32 %v1039, %v811
    %v1080 = vsub.f32 %v1041, %v813
    %v1081 = vsub.f32 %v1044, %v816
    %v1082 = vsub.f32 %v1046, %v818
    %v1083 = vsub.f32 %v1049, %v821
    %v1084 = vsub.f32 %v1051, %v823
    %v1085 = vsub.f32 %v1069, %v900
    %v1086 = vsub.f32 %v1070, %v902
    %v1087 = vsub.f32 %v1071, %v905
    %v1088 = vsub.f32 %v1072, %v907
    %v1089 = vsub.f32 %v1073, %v910
    %v1090 = vsub.f32 %v1074, %v912
    %v1091 = vsub.f32 %v1075, %v915
    %v1092 = vsub.f32 %v1076, %v917
    %v1093 = vsub.f32 %v1077, %v920
    %v1094 = vsub.f32 %v1078, %v922
    %v1095 = vsub.f32 %v1079, %v925
    %v1096 = vsub.f32 %v1080, %v927
    %v1097 = vsub.f32 %v1081, %v930
    %v1098 = vsub.f32 %v1082, %v932
    %v1099 = vsub.f32 %v1083, %v935
    %v1100 = vsub.f32 %v1084, %v937
    %s1101 = scalar_lea.vmem [#allocation5], 256
    %v1102 = vld [vmem:[%s1101] sm:$0xff]
    %v1103 = vld [vmem:[%s1101 + $0x8] sm:$0xff]
    %v1104 = vld [vmem:[%s1101 + $0x10] sm:$0xff]
    %v1105 = vld [vmem:[%s1101 + $0x18] sm:$0xff]
    %v1106 = vld [vmem:[%s1101 + $0x20] sm:$0xff]
    %v1107 = vld [vmem:[%s1101 + $0x28] sm:$0xff]
    %v1108 = vld [vmem:[%s1101 + $0x30] sm:$0xff]
    %v1109 = vld [vmem:[%s1101 + $0x38] sm:$0xff]
    %v1110 = vld [vmem:[%s1101 + $0x40] sm:$0xff]
    %v1111 = vld [vmem:[%s1101 + $0x48] sm:$0xff]
    %v1112 = vld [vmem:[%s1101 + $0x50] sm:$0xff]
    %v1113 = vld [vmem:[%s1101 + $0x58] sm:$0xff]
    %v1114 = vld [vmem:[%s1101 + $0x60] sm:$0xff]
    %v1115 = vld [vmem:[%s1101 + $0x68] sm:$0xff]
    %v1116 = vld [vmem:[%s1101 + $0x70] sm:$0xff]
    %v1117 = vld [vmem:[%s1101 + $0x78] sm:$0xff]
    %s1118 = scalar_lea.vmem [#allocation5], 384
    %v1119 = vld [vmem:[%s1118] sm:$0xff]
    %v1120 = vld [vmem:[%s1118 + $0x8] sm:$0xff]
    %v1121 = vld [vmem:[%s1118 + $0x10] sm:$0xff]
    %v1122 = vld [vmem:[%s1118 + $0x18] sm:$0xff]
    %v1123 = vld [vmem:[%s1118 + $0x20] sm:$0xff]
    %v1124 = vld [vmem:[%s1118 + $0x28] sm:$0xff]
    %v1125 = vld [vmem:[%s1118 + $0x30] sm:$0xff]
    %v1126 = vld [vmem:[%s1118 + $0x38] sm:$0xff]
    %v1127 = vld [vmem:[%s1118 + $0x40] sm:$0xff]
    %v1128 = vld [vmem:[%s1118 + $0x48] sm:$0xff]
    %v1129 = vld [vmem:[%s1118 + $0x50] sm:$0xff]
    %v1130 = vld [vmem:[%s1118 + $0x58] sm:$0xff]
    %v1131 = vld [vmem:[%s1118 + $0x60] sm:$0xff]
    %v1132 = vld [vmem:[%s1118 + $0x68] sm:$0xff]
    %v1133 = vld [vmem:[%s1118 + $0x70] sm:$0xff]
    %v1134 = vld [vmem:[%s1118 + $0x78] sm:$0xff]
    %v1135 = vmul.f32 %v1053, %v1102
    %v1136 = vmul.f32 %v1054, %v1103
    %v1137 = vmul.f32 %v1055, %v1104
    %v1138 = vmul.f32 %v1056, %v1105
    %v1139 = vmul.f32 %v1057, %v1106
    %v1140 = vmul.f32 %v1058, %v1107
    %v1141 = vmul.f32 %v1059, %v1108
    %v1142 = vmul.f32 %v1060, %v1109
    %v1143 = vmul.f32 %v1061, %v1110
    %v1144 = vmul.f32 %v1062, %v1111
    %v1145 = vmul.f32 %v1063, %v1112
    %v1146 = vmul.f32 %v1064, %v1113
    %v1147 = vmul.f32 %v1065, %v1114
    %v1148 = vmul.f32 %v1066, %v1115
    %v1149 = vmul.f32 %v1067, %v1116
    %v1150 = vmul.f32 %v1068, %v1117
    %v1151 = vmul.f32 %v1085, %v1119
    %v1152 = vmul.f32 %v1086, %v1120
    %v1153 = vmul.f32 %v1087, %v1121
    %v1154 = vmul.f32 %v1088, %v1122
    %v1155 = vmul.f32 %v1089, %v1123
    %v1156 = vmul.f32 %v1090, %v1124
    %v1157 = vmul.f32 %v1091, %v1125
    %v1158 = vmul.f32 %v1092, %v1126
    %v1159 = vmul.f32 %v1093, %v1127
    %v1160 = vmul.f32 %v1094, %v1128
    %v1161 = vmul.f32 %v1095, %v1129
    %v1162 = vmul.f32 %v1096, %v1130
    %v1163 = vmul.f32 %v1097, %v1131
    %v1164 = vmul.f32 %v1098, %v1132
    %v1165 = vmul.f32 %v1099, %v1133
    %v1166 = vmul.f32 %v1100, %v1134
    %v1167 = vsub.f32 %v1135, %v1151
    %v1168 = vsub.f32 %v1136, %v1152
    %v1169 = vsub.f32 %v1137, %v1153
    %v1170 = vsub.f32 %v1138, %v1154
    %v1171 = vsub.f32 %v1139, %v1155
    %v1172 = vsub.f32 %v1140, %v1156
    %v1173 = vsub.f32 %v1141, %v1157
    %v1174 = vsub.f32 %v1142, %v1158
    %v1175 = vsub.f32 %v1143, %v1159
    %v1176 = vsub.f32 %v1144, %v1160
    %v1177 = vsub.f32 %v1145, %v1161
    %v1178 = vsub.f32 %v1146, %v1162
    %v1179 = vsub.f32 %v1147, %v1163
    %v1180 = vsub.f32 %v1148, %v1164
    %v1181 = vsub.f32 %v1149, %v1165
    %v1182 = vsub.f32 %v1150, %v1166
    %v1183 = vmul.f32 %v1053, %v1119
    %v1184 = vmul.f32 %v1054, %v1120
    %v1185 = vmul.f32 %v1055, %v1121
    %v1186 = vmul.f32 %v1056, %v1122
    %v1187 = vmul.f32 %v1057, %v1123
    %v1188 = vmul.f32 %v1058, %v1124
    %v1189 = vmul.f32 %v1059, %v1125
    %v1190 = vmul.f32 %v1060, %v1126
    %v1191 = vmul.f32 %v1061, %v1127
    %v1192 = vmul.f32 %v1062, %v1128
    %v1193 = vmul.f32 %v1063, %v1129
    %v1194 = vmul.f32 %v1064, %v1130
    %v1195 = vmul.f32 %v1065, %v1131
    %v1196 = vmul.f32 %v1066, %v1132
    %v1197 = vmul.f32 %v1067, %v1133
    %v1198 = vmul.f32 %v1068, %v1134
    %v1199 = vmul.f32 %v1085, %v1102
    %v1200 = vmul.f32 %v1086, %v1103
    %v1201 = vmul.f32 %v1087, %v1104
    %v1202 = vmul.f32 %v1088, %v1105
    %v1203 = vmul.f32 %v1089, %v1106
    %v1204 = vmul.f32 %v1090, %v1107
    %v1205 = vmul.f32 %v1091, %v1108
    %v1206 = vmul.f32 %v1092, %v1109
    %v1207 = vmul.f32 %v1093, %v1110
    %v1208 = vmul.f32 %v1094, %v1111
    %v1209 = vmul.f32 %v1095, %v1112
    %v1210 = vmul.f32 %v1096, %v1113
    %v1211 = vmul.f32 %v1097, %v1114
    %v1212 = vmul.f32 %v1098, %v1115
    %v1213 = vmul.f32 %v1099, %v1116
    %v1214 = vmul.f32 %v1100, %v1117
    %v1215 = vadd.f32 %v1183, %v1199
    %v1216 = vadd.f32 %v1184, %v1200
    %v1217 = vadd.f32 %v1185, %v1201
    %v1218 = vadd.f32 %v1186, %v1202
    %v1219 = vadd.f32 %v1187, %v1203
    %v1220 = vadd.f32 %v1188, %v1204
    %v1221 = vadd.f32 %v1189, %v1205
    %v1222 = vadd.f32 %v1190, %v1206
    %v1223 = vadd.f32 %v1191, %v1207
    %v1224 = vadd.f32 %v1192, %v1208
    %v1225 = vadd.f32 %v1193, %v1209
    %v1226 = vadd.f32 %v1194, %v1210
    %v1227 = vadd.f32 %v1195, %v1211
    %v1228 = vadd.f32 %v1196, %v1212
    %v1229 = vadd.f32 %v1197, %v1213
    %v1230 = vadd.f32 %v1198, %v1214
    %v1231 = vpack.c.bf16 %v1168, %v1167
    %v1232 = vpack.c.bf16 %v1170, %v1169
    %v1233 = vpack.c.bf16 %v1172, %v1171
    %v1234 = vpack.c.bf16 %v1174, %v1173
    %v1235 = vpack.c.bf16 %v1176, %v1175
    %v1236 = vpack.c.bf16 %v1178, %v1177
    %v1237 = vpack.c.bf16 %v1180, %v1179
    %v1238 = vpack.c.bf16 %v1182, %v1181
    %v1239 = vpack.c.bf16 %v1216, %v1215
    %v1240 = vpack.c.bf16 %v1218, %v1217
    %v1241 = vpack.c.bf16 %v1220, %v1219
    %v1242 = vpack.c.bf16 %v1222, %v1221
    %v1243 = vpack.c.bf16 %v1224, %v1223
    %v1244 = vpack.c.bf16 %v1226, %v1225
    %v1245 = vpack.c.bf16 %v1228, %v1227
    %v1246 = vpack.c.bf16 %v1230, %v1229
    %v1247 = vadd.f32 %v1167, %v1215
    %v1248 = vadd.f32 %v1168, %v1216
    %v1249 = vadd.f32 %v1169, %v1217
    %v1250 = vadd.f32 %v1170, %v1218
    %v1251 = vadd.f32 %v1171, %v1219
    %v1252 = vadd.f32 %v1172, %v1220
    %v1253 = vadd.f32 %v1173, %v1221
    %v1254 = vadd.f32 %v1174, %v1222
    %v1255 = vadd.f32 %v1175, %v1223
    %v1256 = vadd.f32 %v1176, %v1224
    %v1257 = vadd.f32 %v1177, %v1225
    %v1258 = vadd.f32 %v1178, %v1226
    %v1259 = vadd.f32 %v1179, %v1227
    %v1260 = vadd.f32 %v1180, %v1228
    %v1261 = vadd.f32 %v1181, %v1229
    %v1262 = vadd.f32 %v1182, %v1230
    %v1263 = vpack.c.bf16 %v1248, %v1247
    %v1264 = vpack.c.bf16 %v1250, %v1249
    %v1265 = vpack.c.bf16 %v1252, %v1251
    %v1266 = vpack.c.bf16 %v1254, %v1253
    %v1267 = vpack.c.bf16 %v1256, %v1255
    %v1268 = vpack.c.bf16 %v1258, %v1257
    %v1269 = vpack.c.bf16 %v1260, %v1259
    %v1270 = vpack.c.bf16 %v1262, %v1261
    %1271 = vmatpush.bf16.msra.mxu0 %v1238
    %1272 = vmatpush.bf16.msra.mxu0 %v1237
    %1273 = vmatpush.bf16.msra.mxu0 %v1236
    %1274 = vmatpush.bf16.msra.mxu0 %v1235
    %1275 = vmatpush.bf16.msra.mxu0 %v1234
    %1276 = vmatpush.bf16.msra.mxu0 %v1233
    %1277 = vmatpush.bf16.msra.mxu0 %v1232
    %1278 = vmatpush.bf16.msra.mxu0 %v1231
    %1279 = vmatmul.bf16.gmra.mxu0 %v331
    %v1280 = vpop.f32.mrf.mxu0
    %v1281 = vadd.f32 0.0, %v1280
    %v1282 = vpop.f32.mrf.mxu0
    %v1283 = vadd.f32 0.0, %v1282
    %1284 = vmatmul.bf16.gmra.mxu0 %v332
    %v1285 = vpop.f32.mrf.mxu0
    %v1286 = vadd.f32 0.0, %v1285
    %v1287 = vpop.f32.mrf.mxu0
    %v1288 = vadd.f32 0.0, %v1287
    %1289 = vmatmul.bf16.gmra.mxu0 %v333
    %v1290 = vpop.f32.mrf.mxu0
    %v1291 = vadd.f32 0.0, %v1290
    %v1292 = vpop.f32.mrf.mxu0
    %v1293 = vadd.f32 0.0, %v1292
    %1294 = vmatmul.bf16.gmra.mxu0 %v334
    %v1295 = vpop.f32.mrf.mxu0
    %v1296 = vadd.f32 0.0, %v1295
    %v1297 = vpop.f32.mrf.mxu0
    %v1298 = vadd.f32 0.0, %v1297
    %1299 = vmatmul.bf16.gmra.mxu0 %v335
    %v1300 = vpop.f32.mrf.mxu0
    %v1301 = vadd.f32 0.0, %v1300
    %v1302 = vpop.f32.mrf.mxu0
    %v1303 = vadd.f32 0.0, %v1302
    %1304 = vmatmul.bf16.gmra.mxu0 %v336
    %v1305 = vpop.f32.mrf.mxu0
    %v1306 = vadd.f32 0.0, %v1305
    %v1307 = vpop.f32.mrf.mxu0
    %v1308 = vadd.f32 0.0, %v1307
    %1309 = vmatmul.bf16.gmra.mxu0 %v337
    %v1310 = vpop.f32.mrf.mxu0
    %v1311 = vadd.f32 0.0, %v1310
    %v1312 = vpop.f32.mrf.mxu0
    %v1313 = vadd.f32 0.0, %v1312
    %1314 = vmatmul.bf16.gmra.mxu0 %v338
    %v1315 = vpop.f32.mrf.mxu0
    %v1316 = vadd.f32 0.0, %v1315
    %v1317 = vpop.f32.mrf.mxu0
    %v1318 = vadd.f32 0.0, %v1317
    %1319 = vdwg.mxu0
    %1320 = vmatpush.bf16.msra.mxu0 %v1246
    %1321 = vmatpush.bf16.msra.mxu0 %v1245
    %1322 = vmatpush.bf16.msra.mxu0 %v1244
    %1323 = vmatpush.bf16.msra.mxu0 %v1243
    %1324 = vmatpush.bf16.msra.mxu0 %v1242
    %1325 = vmatpush.bf16.msra.mxu0 %v1241
    %1326 = vmatpush.bf16.msra.mxu0 %v1240
    %1327 = vmatpush.bf16.msra.mxu0 %v1239
    %1328 = vmatmul.bf16.gmra.mxu0 %v445
    %v1329 = vpop.f32.mrf.mxu0
    %v1330 = vadd.f32 0.0, %v1329
    %v1331 = vpop.f32.mrf.mxu0
    %v1332 = vadd.f32 0.0, %v1331
    %1333 = vmatmul.bf16.gmra.mxu0 %v446
    %v1334 = vpop.f32.mrf.mxu0
    %v1335 = vadd.f32 0.0, %v1334
    %v1336 = vpop.f32.mrf.mxu0
    %v1337 = vadd.f32 0.0, %v1336
    %1338 = vmatmul.bf16.gmra.mxu0 %v447
    %v1339 = vpop.f32.mrf.mxu0
    %v1340 = vadd.f32 0.0, %v1339
    %v1341 = vpop.f32.mrf.mxu0
    %v1342 = vadd.f32 0.0, %v1341
    %1343 = vmatmul.bf16.gmra.mxu0 %v448
    %v1344 = vpop.f32.mrf.mxu0
    %v1345 = vadd.f32 0.0, %v1344
    %v1346 = vpop.f32.mrf.mxu0
    %v1347 = vadd.f32 0.0, %v1346
    %1348 = vmatmul.bf16.gmra.mxu0 %v449
    %v1349 = vpop.f32.mrf.mxu0
    %v1350 = vadd.f32 0.0, %v1349
    %v1351 = vpop.f32.mrf.mxu0
    %v1352 = vadd.f32 0.0, %v1351
    %1353 = vmatmul.bf16.gmra.mxu0 %v450
    %v1354 = vpop.f32.mrf.mxu0
    %v1355 = vadd.f32 0.0, %v1354
    %v1356 = vpop.f32.mrf.mxu0
    %v1357 = vadd.f32 0.0, %v1356
    %1358 = vmatmul.bf16.gmra.mxu0 %v451
    %v1359 = vpop.f32.mrf.mxu0
    %v1360 = vadd.f32 0.0, %v1359
    %v1361 = vpop.f32.mrf.mxu0
    %v1362 = vadd.f32 0.0, %v1361
    %1363 = vmatmul.bf16.gmra.mxu0 %v452
    %v1364 = vpop.f32.mrf.mxu0
    %v1365 = vadd.f32 0.0, %v1364
    %v1366 = vpop.f32.mrf.mxu0
    %v1367 = vadd.f32 0.0, %v1366
    %1368 = vdwg.mxu0
    %1369 = vmatpush.bf16.msra.mxu0 %v1270
    %1370 = vmatpush.bf16.msra.mxu0 %v1269
    %1371 = vmatpush.bf16.msra.mxu0 %v1268
    %1372 = vmatpush.bf16.msra.mxu0 %v1267
    %1373 = vmatpush.bf16.msra.mxu0 %v1266
    %1374 = vmatpush.bf16.msra.mxu0 %v1265
    %1375 = vmatpush.bf16.msra.mxu0 %v1264
    %1376 = vmatpush.bf16.msra.mxu0 %v1263
    %1377 = vmatmul.bf16.gmra.mxu0 %v559
    %v1378 = vpop.f32.mrf.mxu0
    %v1379 = vadd.f32 0.0, %v1378
    %v1380 = vpop.f32.mrf.mxu0
    %v1381 = vadd.f32 0.0, %v1380
    %1382 = vmatmul.bf16.gmra.mxu0 %v560
    %v1383 = vpop.f32.mrf.mxu0
    %v1384 = vadd.f32 0.0, %v1383
    %v1385 = vpop.f32.mrf.mxu0
    %v1386 = vadd.f32 0.0, %v1385
    %1387 = vmatmul.bf16.gmra.mxu0 %v561
    %v1388 = vpop.f32.mrf.mxu0
    %v1389 = vadd.f32 0.0, %v1388
    %v1390 = vpop.f32.mrf.mxu0
    %v1391 = vadd.f32 0.0, %v1390
    %1392 = vmatmul.bf16.gmra.mxu0 %v562
    %v1393 = vpop.f32.mrf.mxu0
    %v1394 = vadd.f32 0.0, %v1393
    %v1395 = vpop.f32.mrf.mxu0
    %v1396 = vadd.f32 0.0, %v1395
    %1397 = vmatmul.bf16.gmra.mxu0 %v563
    %v1398 = vpop.f32.mrf.mxu0
    %v1399 = vadd.f32 0.0, %v1398
    %v1400 = vpop.f32.mrf.mxu0
    %v1401 = vadd.f32 0.0, %v1400
    %1402 = vmatmul.bf16.gmra.mxu0 %v564
    %v1403 = vpop.f32.mrf.mxu0
    %v1404 = vadd.f32 0.0, %v1403
    %v1405 = vpop.f32.mrf.mxu0
    %v1406 = vadd.f32 0.0, %v1405
    %1407 = vmatmul.bf16.gmra.mxu0 %v565
    %v1408 = vpop.f32.mrf.mxu0
    %v1409 = vadd.f32 0.0, %v1408
    %v1410 = vpop.f32.mrf.mxu0
    %v1411 = vadd.f32 0.0, %v1410
    %1412 = vmatmul.bf16.gmra.mxu0 %v566
    %v1413 = vpop.f32.mrf.mxu0
    %v1414 = vadd.f32 0.0, %v1413
    %v1415 = vpop.f32.mrf.mxu0
    %v1416 = vadd.f32 0.0, %v1415
    %1417 = vdwg.mxu0
    %v1418 = vsub.f32 %v1281, %v1330
    %v1419 = vsub.f32 %v1283, %v1332
    %v1420 = vsub.f32 %v1286, %v1335
    %v1421 = vsub.f32 %v1288, %v1337
    %v1422 = vsub.f32 %v1291, %v1340
    %v1423 = vsub.f32 %v1293, %v1342
    %v1424 = vsub.f32 %v1296, %v1345
    %v1425 = vsub.f32 %v1298, %v1347
    %v1426 = vsub.f32 %v1301, %v1350
    %v1427 = vsub.f32 %v1303, %v1352
    %v1428 = vsub.f32 %v1306, %v1355
    %v1429 = vsub.f32 %v1308, %v1357
    %v1430 = vsub.f32 %v1311, %v1360
    %v1431 = vsub.f32 %v1313, %v1362
    %v1432 = vsub.f32 %v1316, %v1365
    %v1433 = vsub.f32 %v1318, %v1367
    %v1434 = vsub.f32 %v1379, %v1281
    %v1435 = vsub.f32 %v1381, %v1283
    %v1436 = vsub.f32 %v1384, %v1286
    %v1437 = vsub.f32 %v1386, %v1288
    %v1438 = vsub.f32 %v1389, %v1291
    %v1439 = vsub.f32 %v1391, %v1293
    %v1440 = vsub.f32 %v1394, %v1296
    %v1441 = vsub.f32 %v1396, %v1298
    %v1442 = vsub.f32 %v1399, %v1301
    %v1443 = vsub.f32 %v1401, %v1303
    %v1444 = vsub.f32 %v1404, %v1306
    %v1445 = vsub.f32 %v1406, %v1308
    %v1446 = vsub.f32 %v1409, %v1311
    %v1447 = vsub.f32 %v1411, %v1313
    %v1448 = vsub.f32 %v1414, %v1316
    %v1449 = vsub.f32 %v1416, %v1318
    %v1450 = vsub.f32 %v1434, %v1330
    %v1451 = vsub.f32 %v1435, %v1332
    %v1452 = vsub.f32 %v1436, %v1335
    %v1453 = vsub.f32 %v1437, %v1337
    %v1454 = vsub.f32 %v1438, %v1340
    %v1455 = vsub.f32 %v1439, %v1342
    %v1456 = vsub.f32 %v1440, %v1345
    %v1457 = vsub.f32 %v1441, %v1347
    %v1458 = vsub.f32 %v1442, %v1350
    %v1459 = vsub.f32 %v1443, %v1352
    %v1460 = vsub.f32 %v1444, %v1355
    %v1461 = vsub.f32 %v1445, %v1357
    %v1462 = vsub.f32 %v1446, %v1360
    %v1463 = vsub.f32 %v1447, %v1362
    %v1464 = vsub.f32 %v1448, %v1365
    %v1465 = vsub.f32 %v1449, %v1367
    %v1466 = vpack.c.bf16 %v1419, %v1418
    %v1467 = vpack.c.bf16 %v1421, %v1420
    %v1468 = vpack.c.bf16 %v1423, %v1422
    %v1469 = vpack.c.bf16 %v1425, %v1424
    %v1470 = vpack.c.bf16 %v1427, %v1426
    %v1471 = vpack.c.bf16 %v1429, %v1428
    %v1472 = vpack.c.bf16 %v1431, %v1430
    %v1473 = vpack.c.bf16 %v1433, %v1432
    %v1474 = vpack.c.bf16 %v1451, %v1450
    %v1475 = vpack.c.bf16 %v1453, %v1452
    %v1476 = vpack.c.bf16 %v1455, %v1454
    %v1477 = vpack.c.bf16 %v1457, %v1456
    %v1478 = vpack.c.bf16 %v1459, %v1458
    %v1479 = vpack.c.bf16 %v1461, %v1460
    %v1480 = vpack.c.bf16 %v1463, %v1462
    %v1481 = vpack.c.bf16 %v1465, %v1464
    %v1482 = vadd.f32 %v1418, %v1450
    %v1483 = vadd.f32 %v1419, %v1451
    %v1484 = vadd.f32 %v1420, %v1452
    %v1485 = vadd.f32 %v1421, %v1453
    %v1486 = vadd.f32 %v1422, %v1454
    %v1487 = vadd.f32 %v1423, %v1455
    %v1488 = vadd.f32 %v1424, %v1456
    %v1489 = vadd.f32 %v1425, %v1457
    %v1490 = vadd.f32 %v1426, %v1458
    %v1491 = vadd.f32 %v1427, %v1459
    %v1492 = vadd.f32 %v1428, %v1460
    %v1493 = vadd.f32 %v1429, %v1461
    %v1494 = vadd.f32 %v1430, %v1462
    %v1495 = vadd.f32 %v1431, %v1463
    %v1496 = vadd.f32 %v1432, %v1464
    %v1497 = vadd.f32 %v1433, %v1465
    %v1498 = vpack.c.bf16 %v1483, %v1482
    %v1499 = vpack.c.bf16 %v1485, %v1484
    %v1500 = vpack.c.bf16 %v1487, %v1486
    %v1501 = vpack.c.bf16 %v1489, %v1488
    %v1502 = vpack.c.bf16 %v1491, %v1490
    %v1503 = vpack.c.bf16 %v1493, %v1492
    %v1504 = vpack.c.bf16 %v1495, %v1494
    %v1505 = vpack.c.bf16 %v1497, %v1496
    %1506 = vmatpush.bf16.msra.mxu0 %v767
    %1507 = vmatpush.bf16.msra.mxu0 %v766
    %1508 = vmatpush.bf16.msra.mxu0 %v765
    %1509 = vmatpush.bf16.msra.mxu0 %v764
    %1510 = vmatpush.bf16.msra.mxu0 %v763
    %1511 = vmatpush.bf16.msra.mxu0 %v762
    %1512 = vmatpush.bf16.msra.mxu0 %v761
    %1513 = vmatpush.bf16.msra.mxu0 %v760
    %1514 = vmatmul.bf16.gmra.mxu0 %v1466
    %v1515 = vpop.f32.mrf.mxu0
    %v1516 = vadd.f32 0.0, %v1515
    %v1517 = vpop.f32.mrf.mxu0
    %v1518 = vadd.f32 0.0, %v1517
    %1519 = vmatmul.bf16.gmra.mxu0 %v1467
    %v1520 = vpop.f32.mrf.mxu0
    %v1521 = vadd.f32 0.0, %v1520
    %v1522 = vpop.f32.mrf.mxu0
    %v1523 = vadd.f32 0.0, %v1522
    %1524 = vmatmul.bf16.gmra.mxu0 %v1468
    %v1525 = vpop.f32.mrf.mxu0
    %v1526 = vadd.f32 0.0, %v1525
    %v1527 = vpop.f32.mrf.mxu0
    %v1528 = vadd.f32 0.0, %v1527
    %1529 = vmatmul.bf16.gmra.mxu0 %v1469
    %v1530 = vpop.f32.mrf.mxu0
    %v1531 = vadd.f32 0.0, %v1530
    %v1532 = vpop.f32.mrf.mxu0
    %v1533 = vadd.f32 0.0, %v1532
    %1534 = vmatmul.bf16.gmra.mxu0 %v1470
    %v1535 = vpop.f32.mrf.mxu0
    %v1536 = vadd.f32 0.0, %v1535
    %v1537 = vpop.f32.mrf.mxu0
    %v1538 = vadd.f32 0.0, %v1537
    %1539 = vmatmul.bf16.gmra.mxu0 %v1471
    %v1540 = vpop.f32.mrf.mxu0
    %v1541 = vadd.f32 0.0, %v1540
    %v1542 = vpop.f32.mrf.mxu0
    %v1543 = vadd.f32 0.0, %v1542
    %1544 = vmatmul.bf16.gmra.mxu0 %v1472
    %v1545 = vpop.f32.mrf.mxu0
    %v1546 = vadd.f32 0.0, %v1545
    %v1547 = vpop.f32.mrf.mxu0
    %v1548 = vadd.f32 0.0, %v1547
    %1549 = vmatmul.bf16.gmra.mxu0 %v1473
    %v1550 = vpop.f32.mrf.mxu0
    %v1551 = vadd.f32 0.0, %v1550
    %v1552 = vpop.f32.mrf.mxu0
    %v1553 = vadd.f32 0.0, %v1552
    %1554 = vdwg.mxu0
    %1555 = vmatpush.bf16.msra.mxu0 %v881
    %1556 = vmatpush.bf16.msra.mxu0 %v880
    %1557 = vmatpush.bf16.msra.mxu0 %v879
    %1558 = vmatpush.bf16.msra.mxu0 %v878
    %1559 = vmatpush.bf16.msra.mxu0 %v877
    %1560 = vmatpush.bf16.msra.mxu0 %v876
    %1561 = vmatpush.bf16.msra.mxu0 %v875
    %1562 = vmatpush.bf16.msra.mxu0 %v874
    %1563 = vmatmul.bf16.gmra.mxu0 %v1474
    %v1564 = vpop.f32.mrf.mxu0
    %v1565 = vadd.f32 0.0, %v1564
    %v1566 = vpop.f32.mrf.mxu0
    %v1567 = vadd.f32 0.0, %v1566
    %1568 = vmatmul.bf16.gmra.mxu0 %v1475
    %v1569 = vpop.f32.mrf.mxu0
    %v1570 = vadd.f32 0.0, %v1569
    %v1571 = vpop.f32.mrf.mxu0
    %v1572 = vadd.f32 0.0, %v1571
    %1573 = vmatmul.bf16.gmra.mxu0 %v1476
    %v1574 = vpop.f32.mrf.mxu0
    %v1575 = vadd.f32 0.0, %v1574
    %v1576 = vpop.f32.mrf.mxu0
    %v1577 = vadd.f32 0.0, %v1576
    %1578 = vmatmul.bf16.gmra.mxu0 %v1477
    %v1579 = vpop.f32.mrf.mxu0
    %v1580 = vadd.f32 0.0, %v1579
    %v1581 = vpop.f32.mrf.mxu0
    %v1582 = vadd.f32 0.0, %v1581
    %1583 = vmatmul.bf16.gmra.mxu0 %v1478
    %v1584 = vpop.f32.mrf.mxu0
    %v1585 = vadd.f32 0.0, %v1584
    %v1586 = vpop.f32.mrf.mxu0
    %v1587 = vadd.f32 0.0, %v1586
    %1588 = vmatmul.bf16.gmra.mxu0 %v1479
    %v1589 = vpop.f32.mrf.mxu0
    %v1590 = vadd.f32 0.0, %v1589
    %v1591 = vpop.f32.mrf.mxu0
    %v1592 = vadd.f32 0.0, %v1591
    %1593 = vmatmul.bf16.gmra.mxu0 %v1480
    %v1594 = vpop.f32.mrf.mxu0
    %v1595 = vadd.f32 0.0, %v1594
    %v1596 = vpop.f32.mrf.mxu0
    %v1597 = vadd.f32 0.0, %v1596
    %1598 = vmatmul.bf16.gmra.mxu0 %v1481
    %v1599 = vpop.f32.mrf.mxu0
    %v1600 = vadd.f32 0.0, %v1599
    %v1601 = vpop.f32.mrf.mxu0
    %v1602 = vadd.f32 0.0, %v1601
    %1603 = vdwg.mxu0
    %1604 = vmatpush.bf16.msra.mxu0 %v995
    %1605 = vmatpush.bf16.msra.mxu0 %v994
    %1606 = vmatpush.bf16.msra.mxu0 %v993
    %1607 = vmatpush.bf16.msra.mxu0 %v992
    %1608 = vmatpush.bf16.msra.mxu0 %v991
    %1609 = vmatpush.bf16.msra.mxu0 %v990
    %1610 = vmatpush.bf16.msra.mxu0 %v989
    %1611 = vmatpush.bf16.msra.mxu0 %v988
    %1612 = vmatmul.bf16.gmra.mxu0 %v1498
    %v1613 = vpop.f32.mrf.mxu0
    %v1614 = vadd.f32 0.0, %v1613
    %v1615 = vpop.f32.mrf.mxu0
    %v1616 = vadd.f32 0.0, %v1615
    %1617 = vmatmul.bf16.gmra.mxu0 %v1499
    %v1618 = vpop.f32.mrf.mxu0
    %v1619 = vadd.f32 0.0, %v1618
    %v1620 = vpop.f32.mrf.mxu0
    %v1621 = vadd.f32 0.0, %v1620
    %1622 = vmatmul.bf16.gmra.mxu0 %v1500
    %v1623 = vpop.f32.mrf.mxu0
    %v1624 = vadd.f32 0.0, %v1623
    %v1625 = vpop.f32.mrf.mxu0
    %v1626 = vadd.f32 0.0, %v1625
    %1627 = vmatmul.bf16.gmra.mxu0 %v1501
    %v1628 = vpop.f32.mrf.mxu0
    %v1629 = vadd.f32 0.0, %v1628
    %v1630 = vpop.f32.mrf.mxu0
    %v1631 = vadd.f32 0.0, %v1630
    %1632 = vmatmul.bf16.gmra.mxu0 %v1502
    %v1633 = vpop.f32.mrf.mxu0
    %v1634 = vadd.f32 0.0, %v1633
    %v1635 = vpop.f32.mrf.mxu0
    %v1636 = vadd.f32 0.0, %v1635
    %1637 = vmatmul.bf16.gmra.mxu0 %v1503
    %v1638 = vpop.f32.mrf.mxu0
    %v1639 = vadd.f32 0.0, %v1638
    %v1640 = vpop.f32.mrf.mxu0
    %v1641 = vadd.f32 0.0, %v1640
    %1642 = vmatmul.bf16.gmra.mxu0 %v1504
    %v1643 = vpop.f32.mrf.mxu0
    %v1644 = vadd.f32 0.0, %v1643
    %v1645 = vpop.f32.mrf.mxu0
    %v1646 = vadd.f32 0.0, %v1645
    %1647 = vmatmul.bf16.gmra.mxu0 %v1505
    %v1648 = vpop.f32.mrf.mxu0
    %v1649 = vadd.f32 0.0, %v1648
    %v1650 = vpop.f32.mrf.mxu0
    %v1651 = vadd.f32 0.0, %v1650
    %1652 = vdwg.mxu0
    %v1653 = vsub.f32 %v1516, %v1565
    %v1654 = vsub.f32 %v1518, %v1567
    %v1655 = vsub.f32 %v1521, %v1570
    %v1656 = vsub.f32 %v1523, %v1572
    %v1657 = vsub.f32 %v1526, %v1575
    %v1658 = vsub.f32 %v1528, %v1577
    %v1659 = vsub.f32 %v1531, %v1580
    %v1660 = vsub.f32 %v1533, %v1582
    %v1661 = vsub.f32 %v1536, %v1585
    %v1662 = vsub.f32 %v1538, %v1587
    %v1663 = vsub.f32 %v1541, %v1590
    %v1664 = vsub.f32 %v1543, %v1592
    %v1665 = vsub.f32 %v1546, %v1595
    %v1666 = vsub.f32 %v1548, %v1597
    %v1667 = vsub.f32 %v1551, %v1600
    %v1668 = vsub.f32 %v1553, %v1602
    %v1669 = vsub.f32 %v1614, %v1516
    %v1670 = vsub.f32 %v1616, %v1518
    %v1671 = vsub.f32 %v1619, %v1521
    %v1672 = vsub.f32 %v1621, %v1523
    %v1673 = vsub.f32 %v1624, %v1526
    %v1674 = vsub.f32 %v1626, %v1528
    %v1675 = vsub.f32 %v1629, %v1531
    %v1676 = vsub.f32 %v1631, %v1533
    %v1677 = vsub.f32 %v1634, %v1536
    %v1678 = vsub.f32 %v1636, %v1538
    %v1679 = vsub.f32 %v1639, %v1541
    %v1680 = vsub.f32 %v1641, %v1543
    %v1681 = vsub.f32 %v1644, %v1546
    %v1682 = vsub.f32 %v1646, %v1548
    %v1683 = vsub.f32 %v1649, %v1551
    %v1684 = vsub.f32 %v1651, %v1553
    %v1685 = vsub.f32 %v1669, %v1565
    %v1686 = vsub.f32 %v1670, %v1567
    %v1687 = vsub.f32 %v1671, %v1570
    %v1688 = vsub.f32 %v1672, %v1572
    %v1689 = vsub.f32 %v1673, %v1575
    %v1690 = vsub.f32 %v1674, %v1577
    %v1691 = vsub.f32 %v1675, %v1580
    %v1692 = vsub.f32 %v1676, %v1582
    %v1693 = vsub.f32 %v1677, %v1585
    %v1694 = vsub.f32 %v1678, %v1587
    %v1695 = vsub.f32 %v1679, %v1590
    %v1696 = vsub.f32 %v1680, %v1592
    %v1697 = vsub.f32 %v1681, %v1595
    %v1698 = vsub.f32 %v1682, %v1597
    %v1699 = vsub.f32 %v1683, %v1600
    %v1700 = vsub.f32 %v1684, %v1602
    %1701 = vst [vmem:[#allocation10] sm:$0xff] %v1653
    %1702 = vst [vmem:[#allocation10 + $0x8] sm:$0xff] %v1654
    %1703 = vst [vmem:[#allocation10 + $0x10] sm:$0xff] %v1655
    %1704 = vst [vmem:[#allocation10 + $0x18] sm:$0xff] %v1656
    %1705 = vst [vmem:[#allocation10 + $0x20] sm:$0xff] %v1657
    %1706 = vst [vmem:[#allocation10 + $0x28] sm:$0xff] %v1658
    %1707 = vst [vmem:[#allocation10 + $0x30] sm:$0xff] %v1659
    %1708 = vst [vmem:[#allocation10 + $0x38] sm:$0xff] %v1660
    %1709 = vst [vmem:[#allocation10 + $0x40] sm:$0xff] %v1661
    %1710 = vst [vmem:[#allocation10 + $0x48] sm:$0xff] %v1662
    %1711 = vst [vmem:[#allocation10 + $0x50] sm:$0xff] %v1663
    %1712 = vst [vmem:[#allocation10 + $0x58] sm:$0xff] %v1664
    %1713 = vst [vmem:[#allocation10 + $0x60] sm:$0xff] %v1665
    %1714 = vst [vmem:[#allocation10 + $0x68] sm:$0xff] %v1666
    %1715 = vst [vmem:[#allocation10 + $0x70] sm:$0xff] %v1667
    %1716 = vst [vmem:[#allocation10 + $0x78] sm:$0xff] %v1668
    %s1717 = scalar_lea.vmem [#allocation10], 128
    %1718 = vst [vmem:[%s1717] sm:$0xff] %v1685
    %1719 = vst [vmem:[%s1717 + $0x8] sm:$0xff] %v1686
    %1720 = vst [vmem:[%s1717 + $0x10] sm:$0xff] %v1687
    %1721 = vst [vmem:[%s1717 + $0x18] sm:$0xff] %v1688
    %1722 = vst [vmem:[%s1717 + $0x20] sm:$0xff] %v1689
    %1723 = vst [vmem:[%s1717 + $0x28] sm:$0xff] %v1690
    %1724 = vst [vmem:[%s1717 + $0x30] sm:$0xff] %v1691
    %1725 = vst [vmem:[%s1717 + $0x38] sm:$0xff] %v1692
    %1726 = vst [vmem:[%s1717 + $0x40] sm:$0xff] %v1693
    %1727 = vst [vmem:[%s1717 + $0x48] sm:$0xff] %v1694
    %1728 = vst [vmem:[%s1717 + $0x50] sm:$0xff] %v1695
    %1729 = vst [vmem:[%s1717 + $0x58] sm:$0xff] %v1696
    %1730 = vst [vmem:[%s1717 + $0x60] sm:$0xff] %v1697
    %1731 = vst [vmem:[%s1717 + $0x68] sm:$0xff] %v1698
    %1732 = vst [vmem:[%s1717 + $0x70] sm:$0xff] %v1699
    %1733 = vst [vmem:[%s1717 + $0x78] sm:$0xff] %v1700
    // Predicated region
    $region34: #{tpu_custom_call.1} parent=1 // pred_check
      _
    $region35: #{tpu_custom_call.1} parent=1 // pred_check_branch
      %1735 = sbr.rel (0) target = $region37
    $region36: #{tpu_custom_call.1} parent=1 // pred_region
      %1737 = vsyncadd [#allocation4], 0
      %s1738 = sshll.u32 [#allocation10], 4
      %s1739 = int_to_ptr.vmem [resolvable:$true] %s1738
      %s1740 = sshll.u32 %s4, 4
      %s1741 = int_to_ptr.hbm [resolvable:$true] %s1740
      %1746 = dma.vmem_to_hbm [thread:$0]  %s1739, 4096, %s1741, [#allocation4], 128, 128, 8
    $region37: #{tpu_custom_call.1} parent=1 // pred_fallthru
      _
    // Predicated region
    $region38: #{tpu_custom_call.1} parent=1 // pred_check
      _
    $region39: #{tpu_custom_call.1} parent=1 // pred_check_branch
      %1748 = sbr.rel (0) target = $region41
    $region40: #{tpu_custom_call.1} parent=1 // pred_region
      %1750 = dma.done [#allocation4], 4096
    $region41: #{tpu_custom_call.1} parent=1 // pred_fallthru
      _
    %1751 = vsyncpa [#allocation3], 1
    %1752 = vsyncpa [#allocation6], 1
    %1753 = vsyncpa [#allocation9], 1
    %1754 = vsyncpa [#allocation4], 1

</llo_original>
